<compile_context>
chip_gen: v6e
topology: v6e:2x2x1
jax: 0.10.0
libtpu: 0.0.40
codegen_flags: <defaults>
</compile_context>

<pallas_src>
import functools
import math

import jax
import jax.numpy as jnp
from jax import lax
from jax.experimental import pallas as pl
from jax.experimental.pallas import tpu as pltpu

CFG = dict(
    vocab_size=128,
    context_length=16,
    emb_dim=32,
    n_heads=4,
    n_layers=2,
    drop_rate=0.0,
    qkv_bias=False,
)
EPS = 1e-5                              # PyTorch nn.LayerNorm default (Python float)
MASK_VAL = -1e30                        # finite causal-mask value (no inf-inf NaN hazard)
SQRT_2_OVER_PI = math.sqrt(2.0 / math.pi)


# ---------------------------------------------------------------------------
# In-kernel helpers (pure jnp, traced inside the Pallas body; only Python
# scalar literals -> nothing is captured as a jaxpr constant)
# ---------------------------------------------------------------------------
def _layernorm(x, gamma, beta):
    mean = jnp.mean(x, axis=-1, keepdims=True)
    var = jnp.mean((x - mean) ** 2, axis=-1, keepdims=True)   # biased, like torch
    return (x - mean) * lax.rsqrt(var + EPS) * gamma + beta


def _gelu_tanh(x):
    # GELU tanh approximation (as used in the GPT-from-scratch FeedForward).
    return 0.5 * x * (1.0 + jnp.tanh(SQRT_2_OVER_PI * (x + 0.044715 * x * x * x)))


# ---------------------------------------------------------------------------
# Fused forward kernel: grid = (n_layers,), all B*S rows resident in VMEM
# ---------------------------------------------------------------------------
def gpt_fused_kernel(
    x_ref,        # (R, E)   embedded input rows (R = B*S), f32
    mask_ref,     # (R, R)   additive block-diag causal mask (0 / -1e30), f32
    wqkv_ref,     # (E, 3E)  fused Q|K|V weight (layer axis squeezed), bf16
    wo_ref,       # (E, E)   attention output projection, bf16
    wf1_ref,      # (E, 4E)  FFN up projection, bf16
    wf2_ref,      # (4E, E)  FFN down projection, bf16
    vecs_ref,     # (8, E)   packed per-layer vectors, f32
                  #          rows: 0=ln1.g 1=ln1.b 2=attn.b_out 3=ln2.g 4=ln2.b 5=ffn.b2
    bf1_ref,      # (1, 4E)  FFN up-projection bias, f32
    lnf_ref,      # (2, E)   final LayerNorm gamma/beta, f32
    wout_ref,     # (E, V)   tied output head (tok_emb.T), bf16
    logits_ref,   # (R, V)   output, lane-dense (V = 128)
    x_sc,         # (R, E)   VMEM scratch: running activation, f32
    *, n_heads,
):
    layer = pl.program_id(0)

    # Load the embedding rows into the resident activation once.
    @pl.when(layer == 0)
    def _():
        x_sc[...] = x_ref[...]

    x = x_sc[...]                                   # (R, E) f32
    R, E = x.shape
    hd = E // n_heads
    scale = 1.0 / float(hd) ** 0.5                  # Python float literal

    vecs = vecs_ref[...]
    g1, b1, bo = vecs[0:1, :], vecs[1:2, :], vecs[2:3, :]
    g2, b2, bf2 = vecs[3:4, :], vecs[4:5, :], vecs[5:6, :]

    # ---- attention sub-block: x += W_o( softmax(QK^T/sqrt(hd) + mask) V ) ----
    h = _layernorm(x, g1, b1)
    qkv = jnp.dot(h.astype(jnp.bfloat16), wqkv_ref[...],
                  preferred_element_type=jnp.float32)          # (R, 3E), one MXU call
    q, k, v = qkv[:, :E], qkv[:, E:2 * E], qkv[:, 2 * E:]

    bias = mask_ref[...]                                        # (R, R) additive mask
    ctx_heads = []
    for hh in range(n_heads):                                   # static unroll, H = 4
        lo = hh * hd
        qh, kh, vh = q[:, lo:lo + hd], k[:, lo:lo + hd], v[:, lo:lo + hd]
        s = jnp.dot(qh, kh.T, preferred_element_type=jnp.float32) * scale + bias
        s = s - jnp.max(s, axis=-1, keepdims=True)
        p = jnp.exp(s)
        p = p * pl.reciprocal(jnp.sum(p, axis=-1, keepdims=True), approx=True)
        ctx_heads.append(jnp.dot(p, vh, preferred_element_type=jnp.float32))
    ctx = jnp.concatenate(ctx_heads, axis=-1)                   # (R, E), lane concat only

    x = x + jnp.dot(ctx.astype(jnp.bfloat16), wo_ref[...],
                    preferred_element_type=jnp.float32) + bo    # shortcut; dropout = identity

    # ---- feed-forward sub-block: x += W2( gelu(W1 LN2(x) + b1) ) + b2 ----
    h = _layernorm(x, g2, b2)
    h = jnp.dot(h.astype(jnp.bfloat16), wf1_ref[...],
                preferred_element_type=jnp.float32) + bf1_ref[...]   # (R, 128) lane-dense
    h = _gelu_tanh(h)
    x = x + jnp.dot(h.astype(jnp.bfloat16), wf2_ref[...],
                    preferred_element_type=jnp.float32) + bf2

    x_sc[...] = x

    # ---- last layer: final LayerNorm + tied output head ----
    @pl.when(layer == pl.num_programs(0) - 1)
    def _():
        xf = _layernorm(x, lnf_ref[0:1, :], lnf_ref[1:2, :])
        logits_ref[...] = jnp.dot(xf.astype(jnp.bfloat16), wout_ref[...],
                                  preferred_element_type=jnp.float32)   # (R, 128)


# ---------------------------------------------------------------------------
# pallas_call wrapper
# ---------------------------------------------------------------------------
def gpt_forward(in_idx, params, cfg):
    B, S = in_idx.shape
    E, V, NL = cfg['emb_dim'], cfg['vocab_size'], cfg['n_layers']
    R = B * S

    # Embedding gather + positional add in JAX glue (data-dependent gather).
    tok = params['tok_emb'][in_idx]                      # (B, S, E) f32
    pos = params['pos_emb'][:S]                          # (S, E)
    x = (tok + pos[None, :, :]).reshape(R, E)
    # TODO(synk): drop_emb / attention / shortcut dropout are identity (eval mode).

    # Block-diagonal (same-sequence) causal additive mask over the collapsed rows.
    r = jnp.arange(R)
    same_seq = (r[:, None] // S) == (r[None, :] // S)
    causal = (r[None, :] % S) <= (r[:, None] % S)
    mask = jnp.where(same_seq & causal, 0.0, MASK_VAL).astype(jnp.float32)   # (R, R)

    # Tied output head: transpose once to (E, V); bf16 MXU operand.
    wout = params['tok_emb'].T.astype(jnp.bfloat16)      # (E, V)

    p = params['stacked']

    def layer_spec(arr):
        nd = arr.ndim - 1
        return pl.BlockSpec((None,) + arr.shape[1:], lambda l: (l,) + (0,) * nd)

    def full_spec(arr):
        nd = arr.ndim
        return pl.BlockSpec(arr.shape, lambda l: (0,) * nd)

    in_specs = [
        full_spec(x), full_spec(mask),
        layer_spec(p['wqkv']), layer_spec(p['wo']),
        layer_spec(p['wf1']), layer_spec(p['wf2']),
        layer_spec(p['vecs']), layer_spec(p['bf1']),
        full_spec(params['lnf']), full_spec(wout),
    ]
    out_specs = pl.BlockSpec((R, V), lambda l: (0, 0))

    logits = pl.pallas_call(
        functools.partial(gpt_fused_kernel, n_heads=cfg['n_heads']),
        out_shape=jax.ShapeDtypeStruct((R, V), jnp.float32),
        grid_spec=pltpu.PrefetchScalarGridSpec(
            num_scalar_prefetch=0,
            grid=(NL,),
            in_specs=in_specs,
            out_specs=out_specs,
            scratch_shapes=[pltpu.VMEM((R, E), jnp.float32)],
        ),
        compiler_params=pltpu.CompilerParams(
            dimension_semantics=("arbitrary",)),
    )(x, mask, p['wqkv'], p['wo'], p['wf1'], p['wf2'], p['vecs'], p['bf1'],
      params['lnf'], wout)

    return logits.reshape(B, S, V)


# ---------------------------------------------------------------------------
# Parameter construction (deterministic, synthetic; per-layer weights stacked
# with a leading layer axis, Linear weights stored as [in, out] -- note that
# real torch nn.Linear weights are (out, in) and would need a transpose)
# ---------------------------------------------------------------------------
def init_params(key, cfg):
    V, Lc, E, NL = cfg['vocab_size'], cfg['context_length'], cfg['emb_dim'], cfg['n_layers']
    H4 = 4 * E

    def nrm(k, shape, dtype=jnp.float32, std=0.02):
        return (std * jax.random.normal(k, shape)).astype(dtype)

    keys = jax.random.split(key, 6)

    # Packed per-layer vectors: rows 0=ln1.g 1=ln1.b 2=attn.b_out 3=ln2.g 4=ln2.b 5=ffn.b2 (6,7 pad)
    vecs = jnp.zeros((NL, 8, E), jnp.float32)
    vecs = vecs.at[:, 0, :].set(1.0)   # ln1 gamma
    vecs = vecs.at[:, 3, :].set(1.0)   # ln2 gamma

    lnf = jnp.concatenate([jnp.ones((1, E), jnp.float32),
                           jnp.zeros((1, E), jnp.float32)], axis=0)   # [gamma; beta]

    return dict(
        tok_emb=nrm(keys[0], (V, E)),          # f32; tied with output head
        pos_emb=nrm(keys[1], (Lc, E)),
        lnf=lnf,
        stacked=dict(
            wqkv=nrm(keys[2], (NL, E, 3 * E), jnp.bfloat16),   # fused Q|K|V
            wo=nrm(keys[3], (NL, E, E), jnp.bfloat16),
            wf1=nrm(keys[4], (NL, E, H4), jnp.bfloat16),
            wf2=nrm(keys[5], (NL, H4, E), jnp.bfloat16),
            vecs=vecs,
            bf1=jnp.zeros((NL, 1, H4), jnp.float32),
        ),
    )


if __name__ == "__main__":
    key = jax.random.PRNGKey(0)
    pkey, xkey = jax.random.split(key)
    params = init_params(pkey, CFG)

    batch, seq = 2, 8
    in_idx = jax.random.randint(xkey, (batch, seq), 0, CFG['vocab_size'],
                                dtype=jnp.int32)

    logits = gpt_forward(in_idx, params, CFG)
    logits = jax.block_until_ready(logits)
    assert logits.shape == (batch, seq, CFG['vocab_size'])
    assert bool(jnp.all(jnp.isfinite(logits)))
    print("KERNEL_OK")
</pallas_src>

<mosaic_0001>
module attributes {stable_mosaic.version = 11 : i64} {
  func.func @gpt_fused_kernel(%arg0: i32, %arg1: memref<16x32xf32, #tpu.memory_space<vmem>>, %arg2: memref<16x16xf32, #tpu.memory_space<vmem>>, %arg3: memref<1x32x96xbf16, #tpu.memory_space<vmem>>, %arg4: memref<1x32x32xbf16, #tpu.memory_space<vmem>>, %arg5: memref<1x32x128xbf16, #tpu.memory_space<vmem>>, %arg6: memref<1x128x32xbf16, #tpu.memory_space<vmem>>, %arg7: memref<1x8x32xf32, #tpu.memory_space<vmem>>, %arg8: memref<1x1x128xf32, #tpu.memory_space<vmem>>, %arg9: memref<2x32xf32, #tpu.memory_space<vmem>>, %arg10: memref<32x128xbf16, #tpu.memory_space<vmem>>, %arg11: memref<16x128xf32, #tpu.memory_space<vmem>>, %arg12: memref<16x32xf32, #tpu.memory_space<vmem>>) attributes {dimension_semantics = [#tpu.dimension_semantics<arbitrary>], iteration_bounds = array<i64: 2>, scalar_prefetch = 0 : i64, scratch_operands = 1 : i64, tpu.core_type = #tpu.core_type<tc>, window_params = [{pipeline_mode = #tpu.pipeline_mode<synchronous>, transform_indices = @transform_0, window_bounds = array<i64: 16, 32>}, {pipeline_mode = #tpu.pipeline_mode<synchronous>, transform_indices = @transform_1, window_bounds = array<i64: 16, 16>}, {transform_indices = @transform_2, window_bounds = array<i64: 1, 32, 96>}, {transform_indices = @transform_3, window_bounds = array<i64: 1, 32, 32>}, {transform_indices = @transform_4, window_bounds = array<i64: 1, 32, 128>}, {transform_indices = @transform_5, window_bounds = array<i64: 1, 128, 32>}, {transform_indices = @transform_6, window_bounds = array<i64: 1, 8, 32>}, {transform_indices = @transform_7, window_bounds = array<i64: 1, 1, 128>}, {pipeline_mode = #tpu.pipeline_mode<synchronous>, transform_indices = @transform_8, window_bounds = array<i64: 2, 32>}, {pipeline_mode = #tpu.pipeline_mode<synchronous>, transform_indices = @transform_9, window_bounds = array<i64: 32, 128>}, {pipeline_mode = #tpu.pipeline_mode<synchronous>, transform_indices = @transform_10, window_bounds = array<i64: 16, 128>}]} {
    %c0_i32 = arith.constant 0 : i32
    %0 = arith.cmpi eq, %arg0, %c0_i32 : i32
    %1 = arith.extui %0 : i1 to i32
    %c0_i32_0 = arith.constant 0 : i32
    %2 = arith.cmpi ne, %1, %c0_i32_0 : i32
    scf.if %2 {
      %c0_62 = arith.constant 0 : index
      %c0_63 = arith.constant 0 : index
      %180 = vector.load %arg1[%c0_62, %c0_63] : memref<16x32xf32, #tpu.memory_space<vmem>>, vector<16x32xf32>
      %c0_64 = arith.constant 0 : index
      %c0_65 = arith.constant 0 : index
      %181 = vector.load %arg12[%c0_64, %c0_65] : memref<16x32xf32, #tpu.memory_space<vmem>>, vector<16x32xf32>
      tpu.vector_store %arg12[%c0_64, %c0_65], %180 {strides = array<i32>} : memref<16x32xf32, #tpu.memory_space<vmem>>, vector<16x32xf32>,
    } else {
    }
    %c0 = arith.constant 0 : index
    %c0_1 = arith.constant 0 : index
    %3 = vector.load %arg12[%c0, %c0_1] : memref<16x32xf32, #tpu.memory_space<vmem>>, vector<16x32xf32>
    %c0_2 = arith.constant 0 : index
    %c0_3 = arith.constant 0 : index
    %c0_4 = arith.constant 0 : index
    %4 = vector.load %arg7[%c0_2, %c0_3, %c0_4] : memref<1x8x32xf32, #tpu.memory_space<vmem>>, vector<1x8x32xf32>
    %5 = vector.shape_cast %4 : vector<1x8x32xf32> to vector<8x32xf32>
    %6 = vector.extract_strided_slice %5 {offsets = [0, 0], sizes = [1, 32], strides = [1, 1]} : vector<8x32xf32> to vector<1x32xf32>
    %7 = vector.extract_strided_slice %5 {offsets = [1, 0], sizes = [1, 32], strides = [1, 1]} : vector<8x32xf32> to vector<1x32xf32>
    %8 = vector.extract_strided_slice %5 {offsets = [2, 0], sizes = [1, 32], strides = [1, 1]} : vector<8x32xf32> to vector<1x32xf32>
    %9 = vector.extract_strided_slice %5 {offsets = [3, 0], sizes = [1, 32], strides = [1, 1]} : vector<8x32xf32> to vector<1x32xf32>
    %10 = vector.extract_strided_slice %5 {offsets = [4, 0], sizes = [1, 32], strides = [1, 1]} : vector<8x32xf32> to vector<1x32xf32>
    %11 = vector.extract_strided_slice %5 {offsets = [5, 0], sizes = [1, 32], strides = [1, 1]} : vector<8x32xf32> to vector<1x32xf32>
    %cst = arith.constant dense<0.000000e+00> : vector<16xf32>
    %12 = vector.multi_reduction <add>, %3, %cst [1] : vector<16x32xf32> to vector<16xf32>
    %13 = vector.shape_cast %12 : vector<16xf32> to vector<16x1xf32>
    %cst_5 = arith.constant 3.200000e+01 : f32
    %14 = vector.broadcast %cst_5 : f32 to vector<16x1xf32>
    %15 = arith.divf %13, %14 : vector<16x1xf32>
    %16 = vector.broadcast %15 : vector<16x1xf32> to vector<16x32xf32>
    %17 = arith.subf %3, %16 : vector<16x32xf32>
    %18 = arith.mulf %17, %17 : vector<16x32xf32>
    %cst_6 = arith.constant dense<0.000000e+00> : vector<16xf32>
    %19 = vector.multi_reduction <add>, %18, %cst_6 [1] : vector<16x32xf32> to vector<16xf32>
    %20 = vector.shape_cast %19 : vector<16xf32> to vector<16x1xf32>
    %cst_7 = arith.constant 3.200000e+01 : f32
    %21 = vector.broadcast %cst_7 : f32 to vector<16x1xf32>
    %22 = arith.divf %20, %21 : vector<16x1xf32>
    %23 = vector.broadcast %15 : vector<16x1xf32> to vector<16x32xf32>
    %24 = arith.subf %3, %23 : vector<16x32xf32>
    %cst_8 = arith.constant 9.99999974E-6 : f32
    %25 = vector.broadcast %cst_8 : f32 to vector<16x1xf32>
    %26 = arith.addf %22, %25 : vector<16x1xf32>
    %27 = math.rsqrt %26 : vector<16x1xf32>
    %28 = vector.broadcast %27 : vector<16x1xf32> to vector<16x32xf32>
    %29 = arith.mulf %24, %28 : vector<16x32xf32>
    %30 = vector.broadcast %6 : vector<1x32xf32> to vector<16x32xf32>
    %31 = arith.mulf %29, %30 : vector<16x32xf32>
    %32 = vector.broadcast %7 : vector<1x32xf32> to vector<16x32xf32>
    %33 = arith.addf %31, %32 : vector<16x32xf32>
    %34 = arith.truncf %33 : vector<16x32xf32> to vector<16x32xbf16>
    %c0_9 = arith.constant 0 : index
    %c0_10 = arith.constant 0 : index
    %c0_11 = arith.constant 0 : index
    %35 = vector.load %arg3[%c0_9, %c0_10, %c0_11] : memref<1x32x96xbf16, #tpu.memory_space<vmem>>, vector<1x32x96xbf16>
    %36 = vector.shape_cast %35 : vector<1x32x96xbf16> to vector<32x96xbf16>
    %cst_12 = arith.constant dense<0.000000e+00> : vector<16x96xf32>
    %37 = tpu.matmul %34, %36, %cst_12 {dimension_numbers = #tpu.dot_dimension_numbers<[1], [0], [0], [1], [0, 0, 1, 1], [], []>} : vector<16x32xbf16>, vector<32x96xbf16>, vector<16x96xf32> -> vector<16x96xf32>
    %38 = vector.extract_strided_slice %37 {offsets = [0, 0], sizes = [16, 32], strides = [1, 1]} : vector<16x96xf32> to vector<16x32xf32>
    %39 = vector.extract_strided_slice %37 {offsets = [0, 32], sizes = [16, 32], strides = [1, 1]} : vector<16x96xf32> to vector<16x32xf32>
    %40 = vector.extract_strided_slice %37 {offsets = [0, 64], sizes = [16, 32], strides = [1, 1]} : vector<16x96xf32> to vector<16x32xf32>
    %c0_13 = arith.constant 0 : index
    %c0_14 = arith.constant 0 : index
    %41 = vector.load %arg2[%c0_13, %c0_14] : memref<16x16xf32, #tpu.memory_space<vmem>>, vector<16x16xf32>
    %42 = vector.extract_strided_slice %38 {offsets = [0, 0], sizes = [16, 8], strides = [1, 1]} : vector<16x32xf32> to vector<16x8xf32>
    %43 = vector.extract_strided_slice %39 {offsets = [0, 0], sizes = [16, 8], strides = [1, 1]} : vector<16x32xf32> to vector<16x8xf32>
    %44 = vector.extract_strided_slice %40 {offsets = [0, 0], sizes = [16, 8], strides = [1, 1]} : vector<16x32xf32> to vector<16x8xf32>
    %45 = tpu.transpose %43, [1, 0] : vector<16x8xf32> -> vector<8x16xf32>
    %cst_15 = arith.constant dense<0.000000e+00> : vector<16x16xf32>
    %46 = tpu.matmul %42, %45, %cst_15 {dimension_numbers = #tpu.dot_dimension_numbers<[1], [0], [0], [1], [0, 0, 1, 1], [], []>} : vector<16x8xf32>, vector<8x16xf32>, vector<16x16xf32> -> vector<16x16xf32>
    %cst_16 = arith.constant 0.353553385 : f32
    %47 = vector.broadcast %cst_16 : f32 to vector<16x16xf32>
    %48 = arith.mulf %46, %47 : vector<16x16xf32>
    %49 = arith.addf %48, %41 : vector<16x16xf32>
    %cst_17 = arith.constant dense<0xFF800000> : vector<16xf32>
    %50 = vector.multi_reduction <maximumf>, %49, %cst_17 [1] : vector<16x16xf32> to vector<16xf32>
    %51 = vector.shape_cast %50 : vector<16xf32> to vector<16x1xf32>
    %52 = vector.broadcast %51 : vector<16x1xf32> to vector<16x16xf32>
    %53 = arith.subf %49, %52 : vector<16x16xf32>
    %54 = math.exp %53 : vector<16x16xf32>
    %cst_18 = arith.constant dense<0.000000e+00> : vector<16xf32>
    %55 = vector.multi_reduction <add>, %54, %cst_18 [1] : vector<16x16xf32> to vector<16xf32>
    %56 = vector.shape_cast %55 : vector<16xf32> to vector<16x1xf32>
    %57 = tpu.reciprocal %56 {approx = true} : vector<16x1xf32> -> vector<16x1xf32>
    %58 = vector.broadcast %57 : vector<16x1xf32> to vector<16x16xf32>
    %59 = arith.mulf %54, %58 : vector<16x16xf32>
    %cst_19 = arith.constant dense<0.000000e+00> : vector<16x8xf32>
    %60 = tpu.matmul %59, %44, %cst_19 {dimension_numbers = #tpu.dot_dimension_numbers<[1], [0], [0], [1], [0, 0, 1, 1], [], []>} : vector<16x16xf32>, vector<16x8xf32>, vector<16x8xf32> -> vector<16x8xf32>
    %61 = vector.extract_strided_slice %38 {offsets = [0, 8], sizes = [16, 8], strides = [1, 1]} : vector<16x32xf32> to vector<16x8xf32>
    %62 = vector.extract_strided_slice %39 {offsets = [0, 8], sizes = [16, 8], strides = [1, 1]} : vector<16x32xf32> to vector<16x8xf32>
    %63 = vector.extract_strided_slice %40 {offsets = [0, 8], sizes = [16, 8], strides = [1, 1]} : vector<16x32xf32> to vector<16x8xf32>
    %64 = tpu.transpose %62, [1, 0] : vector<16x8xf32> -> vector<8x16xf32>
    %cst_20 = arith.constant dense<0.000000e+00> : vector<16x16xf32>
    %65 = tpu.matmul %61, %64, %cst_20 {dimension_numbers = #tpu.dot_dimension_numbers<[1], [0], [0], [1], [0, 0, 1, 1], [], []>} : vector<16x8xf32>, vector<8x16xf32>, vector<16x16xf32> -> vector<16x16xf32>
    %cst_21 = arith.constant 0.353553385 : f32
    %66 = vector.broadcast %cst_21 : f32 to vector<16x16xf32>
    %67 = arith.mulf %65, %66 : vector<16x16xf32>
    %68 = arith.addf %67, %41 : vector<16x16xf32>
    %cst_22 = arith.constant dense<0xFF800000> : vector<16xf32>
    %69 = vector.multi_reduction <maximumf>, %68, %cst_22 [1] : vector<16x16xf32> to vector<16xf32>
    %70 = vector.shape_cast %69 : vector<16xf32> to vector<16x1xf32>
    %71 = vector.broadcast %70 : vector<16x1xf32> to vector<16x16xf32>
    %72 = arith.subf %68, %71 : vector<16x16xf32>
    %73 = math.exp %72 : vector<16x16xf32>
    %cst_23 = arith.constant dense<0.000000e+00> : vector<16xf32>
    %74 = vector.multi_reduction <add>, %73, %cst_23 [1] : vector<16x16xf32> to vector<16xf32>
    %75 = vector.shape_cast %74 : vector<16xf32> to vector<16x1xf32>
    %76 = tpu.reciprocal %75 {approx = true} : vector<16x1xf32> -> vector<16x1xf32>
    %77 = vector.broadcast %76 : vector<16x1xf32> to vector<16x16xf32>
    %78 = arith.mulf %73, %77 : vector<16x16xf32>
    %cst_24 = arith.constant dense<0.000000e+00> : vector<16x8xf32>
    %79 = tpu.matmul %78, %63, %cst_24 {dimension_numbers = #tpu.dot_dimension_numbers<[1], [0], [0], [1], [0, 0, 1, 1], [], []>} : vector<16x16xf32>, vector<16x8xf32>, vector<16x8xf32> -> vector<16x8xf32>
    %80 = vector.extract_strided_slice %38 {offsets = [0, 16], sizes = [16, 8], strides = [1, 1]} : vector<16x32xf32> to vector<16x8xf32>
    %81 = vector.extract_strided_slice %39 {offsets = [0, 16], sizes = [16, 8], strides = [1, 1]} : vector<16x32xf32> to vector<16x8xf32>
    %82 = vector.extract_strided_slice %40 {offsets = [0, 16], sizes = [16, 8], strides = [1, 1]} : vector<16x32xf32> to vector<16x8xf32>
    %83 = tpu.transpose %81, [1, 0] : vector<16x8xf32> -> vector<8x16xf32>
    %cst_25 = arith.constant dense<0.000000e+00> : vector<16x16xf32>
    %84 = tpu.matmul %80, %83, %cst_25 {dimension_numbers = #tpu.dot_dimension_numbers<[1], [0], [0], [1], [0, 0, 1, 1], [], []>} : vector<16x8xf32>, vector<8x16xf32>, vector<16x16xf32> -> vector<16x16xf32>
    %cst_26 = arith.constant 0.353553385 : f32
    %85 = vector.broadcast %cst_26 : f32 to vector<16x16xf32>
    %86 = arith.mulf %84, %85 : vector<16x16xf32>
    %87 = arith.addf %86, %41 : vector<16x16xf32>
    %cst_27 = arith.constant dense<0xFF800000> : vector<16xf32>
    %88 = vector.multi_reduction <maximumf>, %87, %cst_27 [1] : vector<16x16xf32> to vector<16xf32>
    %89 = vector.shape_cast %88 : vector<16xf32> to vector<16x1xf32>
    %90 = vector.broadcast %89 : vector<16x1xf32> to vector<16x16xf32>
    %91 = arith.subf %87, %90 : vector<16x16xf32>
    %92 = math.exp %91 : vector<16x16xf32>
    %cst_28 = arith.constant dense<0.000000e+00> : vector<16xf32>
    %93 = vector.multi_reduction <add>, %92, %cst_28 [1] : vector<16x16xf32> to vector<16xf32>
    %94 = vector.shape_cast %93 : vector<16xf32> to vector<16x1xf32>
    %95 = tpu.reciprocal %94 {approx = true} : vector<16x1xf32> -> vector<16x1xf32>
    %96 = vector.broadcast %95 : vector<16x1xf32> to vector<16x16xf32>
    %97 = arith.mulf %92, %96 : vector<16x16xf32>
    %cst_29 = arith.constant dense<0.000000e+00> : vector<16x8xf32>
    %98 = tpu.matmul %97, %82, %cst_29 {dimension_numbers = #tpu.dot_dimension_numbers<[1], [0], [0], [1], [0, 0, 1, 1], [], []>} : vector<16x16xf32>, vector<16x8xf32>, vector<16x8xf32> -> vector<16x8xf32>
    %99 = vector.extract_strided_slice %38 {offsets = [0, 24], sizes = [16, 8], strides = [1, 1]} : vector<16x32xf32> to vector<16x8xf32>
    %100 = vector.extract_strided_slice %39 {offsets = [0, 24], sizes = [16, 8], strides = [1, 1]} : vector<16x32xf32> to vector<16x8xf32>
    %101 = vector.extract_strided_slice %40 {offsets = [0, 24], sizes = [16, 8], strides = [1, 1]} : vector<16x32xf32> to vector<16x8xf32>
    %102 = tpu.transpose %100, [1, 0] : vector<16x8xf32> -> vector<8x16xf32>
    %cst_30 = arith.constant dense<0.000000e+00> : vector<16x16xf32>
    %103 = tpu.matmul %99, %102, %cst_30 {dimension_numbers = #tpu.dot_dimension_numbers<[1], [0], [0], [1], [0, 0, 1, 1], [], []>} : vector<16x8xf32>, vector<8x16xf32>, vector<16x16xf32> -> vector<16x16xf32>
    %cst_31 = arith.constant 0.353553385 : f32
    %104 = vector.broadcast %cst_31 : f32 to vector<16x16xf32>
    %105 = arith.mulf %103, %104 : vector<16x16xf32>
    %106 = arith.addf %105, %41 : vector<16x16xf32>
    %cst_32 = arith.constant dense<0xFF800000> : vector<16xf32>
    %107 = vector.multi_reduction <maximumf>, %106, %cst_32 [1] : vector<16x16xf32> to vector<16xf32>
    %108 = vector.shape_cast %107 : vector<16xf32> to vector<16x1xf32>
    %109 = vector.broadcast %108 : vector<16x1xf32> to vector<16x16xf32>
    %110 = arith.subf %106, %109 : vector<16x16xf32>
    %111 = math.exp %110 : vector<16x16xf32>
    %cst_33 = arith.constant dense<0.000000e+00> : vector<16xf32>
    %112 = vector.multi_reduction <add>, %111, %cst_33 [1] : vector<16x16xf32> to vector<16xf32>
    %113 = vector.shape_cast %112 : vector<16xf32> to vector<16x1xf32>
    %114 = tpu.reciprocal %113 {approx = true} : vector<16x1xf32> -> vector<16x1xf32>
    %115 = vector.broadcast %114 : vector<16x1xf32> to vector<16x16xf32>
    %116 = arith.mulf %111, %115 : vector<16x16xf32>
    %cst_34 = arith.constant dense<0.000000e+00> : vector<16x8xf32>
    %117 = tpu.matmul %116, %101, %cst_34 {dimension_numbers = #tpu.dot_dimension_numbers<[1], [0], [0], [1], [0, 0, 1, 1], [], []>} : vector<16x16xf32>, vector<16x8xf32>, vector<16x8xf32> -> vector<16x8xf32>
    %118 = tpu.concatenate %60, %79, %98, %117 in 1 : vector<16x8xf32>, vector<16x8xf32>, vector<16x8xf32>, vector<16x8xf32> -> vector<16x32xf32>
    %119 = arith.truncf %118 : vector<16x32xf32> to vector<16x32xbf16>
    %c0_35 = arith.constant 0 : index
    %c0_36 = arith.constant 0 : index
    %c0_37 = arith.constant 0 : index
    %120 = vector.load %arg4[%c0_35, %c0_36, %c0_37] : memref<1x32x32xbf16, #tpu.memory_space<vmem>>, vector<1x32x32xbf16>
    %121 = vector.shape_cast %120 : vector<1x32x32xbf16> to vector<32x32xbf16>
    %cst_38 = arith.constant dense<0.000000e+00> : vector<16x32xf32>
    %122 = tpu.matmul %119, %121, %cst_38 {dimension_numbers = #tpu.dot_dimension_numbers<[1], [0], [0], [1], [0, 0, 1, 1], [], []>} : vector<16x32xbf16>, vector<32x32xbf16>, vector<16x32xf32> -> vector<16x32xf32>
    %123 = arith.addf %3, %122 : vector<16x32xf32>
    %124 = vector.broadcast %8 : vector<1x32xf32> to vector<16x32xf32>
    %125 = arith.addf %123, %124 : vector<16x32xf32>
    %cst_39 = arith.constant dense<0.000000e+00> : vector<16xf32>
    %126 = vector.multi_reduction <add>, %125, %cst_39 [1] : vector<16x32xf32> to vector<16xf32>
    %127 = vector.shape_cast %126 : vector<16xf32> to vector<16x1xf32>
    %cst_40 = arith.constant 3.200000e+01 : f32
    %128 = vector.broadcast %cst_40 : f32 to vector<16x1xf32>
    %129 = arith.divf %127, %128 : vector<16x1xf32>
    %130 = vector.broadcast %129 : vector<16x1xf32> to vector<16x32xf32>
    %131 = arith.subf %125, %130 : vector<16x32xf32>
    %132 = arith.mulf %131, %131 : vector<16x32xf32>
    %cst_41 = arith.constant dense<0.000000e+00> : vector<16xf32>
    %133 = vector.multi_reduction <add>, %132, %cst_41 [1] : vector<16x32xf32> to vector<16xf32>
    %134 = vector.shape_cast %133 : vector<16xf32> to vector<16x1xf32>
    %cst_42 = arith.constant 3.200000e+01 : f32
    %135 = vector.broadcast %cst_42 : f32 to vector<16x1xf32>
    %136 = arith.divf %134, %135 : vector<16x1xf32>
    %137 = vector.broadcast %129 : vector<16x1xf32> to vector<16x32xf32>
    %138 = arith.subf %125, %137 : vector<16x32xf32>
    %cst_43 = arith.constant 9.99999974E-6 : f32
    %139 = vector.broadcast %cst_43 : f32 to vector<16x1xf32>
    %140 = arith.addf %136, %139 : vector<16x1xf32>
    %141 = math.rsqrt %140 : vector<16x1xf32>
    %142 = vector.broadcast %141 : vector<16x1xf32> to vector<16x32xf32>
    %143 = arith.mulf %138, %142 : vector<16x32xf32>
    %144 = vector.broadcast %9 : vector<1x32xf32> to vector<16x32xf32>
    %145 = arith.mulf %143, %144 : vector<16x32xf32>
    %146 = vector.broadcast %10 : vector<1x32xf32> to vector<16x32xf32>
    %147 = arith.addf %145, %146 : vector<16x32xf32>
    %148 = arith.truncf %147 : vector<16x32xf32> to vector<16x32xbf16>
    %c0_44 = arith.constant 0 : index
    %c0_45 = arith.constant 0 : index
    %c0_46 = arith.constant 0 : index
    %149 = vector.load %arg5[%c0_44, %c0_45, %c0_46] : memref<1x32x128xbf16, #tpu.memory_space<vmem>>, vector<1x32x128xbf16>
    %150 = vector.shape_cast %149 : vector<1x32x128xbf16> to vector<32x128xbf16>
    %cst_47 = arith.constant dense<0.000000e+00> : vector<16x128xf32>
    %151 = tpu.matmul %148, %150, %cst_47 {dimension_numbers = #tpu.dot_dimension_numbers<[1], [0], [0], [1], [0, 0, 1, 1], [], []>} : vector<16x32xbf16>, vector<32x128xbf16>, vector<16x128xf32> -> vector<16x128xf32>
    %c0_48 = arith.constant 0 : index
    %c0_49 = arith.constant 0 : index
    %c0_50 = arith.constant 0 : index
    %152 = vector.load %arg8[%c0_48, %c0_49, %c0_50] : memref<1x1x128xf32, #tpu.memory_space<vmem>>, vector<1x1x128xf32>
    %153 = vector.shape_cast %152 : vector<1x1x128xf32> to vector<1x128xf32>
    %154 = vector.broadcast %153 : vector<1x128xf32> to vector<16x128xf32>
    %155 = arith.addf %151, %154 : vector<16x128xf32>
    %cst_51 = arith.constant 5.000000e-01 : f32
    %156 = vector.broadcast %cst_51 : f32 to vector<16x128xf32>
    %157 = arith.mulf %156, %155 : vector<16x128xf32>
    %cst_52 = arith.constant 4.471500e-02 : f32
    %158 = vector.broadcast %cst_52 : f32 to vector<16x128xf32>
    %159 = arith.mulf %158, %155 : vector<16x128xf32>
    %160 = arith.mulf %159, %155 : vector<16x128xf32>
    %161 = arith.mulf %160, %155 : vector<16x128xf32>
    %162 = arith.addf %155, %161 : vector<16x128xf32>
    %cst_53 = arith.constant 0.797884583 : f32
    %163 = vector.broadcast %cst_53 : f32 to vector<16x128xf32>
    %164 = arith.mulf %163, %162 : vector<16x128xf32>
    %165 = math.tanh %164 : vector<16x128xf32>
    %cst_54 = arith.constant 1.000000e+00 : f32
    %166 = vector.broadcast %cst_54 : f32 to vector<16x128xf32>
    %167 = arith.addf %166, %165 : vector<16x128xf32>
    %168 = arith.mulf %157, %167 : vector<16x128xf32>
    %169 = arith.truncf %168 : vector<16x128xf32> to vector<16x128xbf16>
    %c0_55 = arith.constant 0 : index
    %c0_56 = arith.constant 0 : index
    %c0_57 = arith.constant 0 : index
    %170 = vector.load %arg6[%c0_55, %c0_56, %c0_57] : memref<1x128x32xbf16, #tpu.memory_space<vmem>>, vector<1x128x32xbf16>
    %171 = vector.shape_cast %170 : vector<1x128x32xbf16> to vector<128x32xbf16>
    %cst_58 = arith.constant dense<0.000000e+00> : vector<16x32xf32>
    %172 = tpu.matmul %169, %171, %cst_58 {dimension_numbers = #tpu.dot_dimension_numbers<[1], [0], [0], [1], [0, 0, 1, 1], [], []>} : vector<16x128xbf16>, vector<128x32xbf16>, vector<16x32xf32> -> vector<16x32xf32>
    %173 = arith.addf %125, %172 : vector<16x32xf32>
    %174 = vector.broadcast %11 : vector<1x32xf32> to vector<16x32xf32>
    %175 = arith.addf %173, %174 : vector<16x32xf32>
    %c0_59 = arith.constant 0 : index
    %c0_60 = arith.constant 0 : index
    %176 = vector.load %arg12[%c0_59, %c0_60] : memref<16x32xf32, #tpu.memory_space<vmem>>, vector<16x32xf32>
    tpu.vector_store %arg12[%c0_59, %c0_60], %175 {strides = array<i32>} : memref<16x32xf32, #tpu.memory_space<vmem>>, vector<16x32xf32>,
    %c1_i32 = arith.constant 1 : i32
    %177 = arith.cmpi eq, %arg0, %c1_i32 : i32
    %178 = arith.extui %177 : i1 to i32
    %c0_i32_61 = arith.constant 0 : i32
    %179 = arith.cmpi ne, %178, %c0_i32_61 : i32
    scf.if %179 {
      %c0_62 = arith.constant 0 : index
      %c0_63 = arith.constant 0 : index
      %180 = vector.load %arg9[%c0_62, %c0_63] : memref<2x32xf32, #tpu.memory_space<vmem>>, vector<1x32xf32>
      %c1 = arith.constant 1 : index
      %c0_64 = arith.constant 0 : index
      %181 = vector.load %arg9[%c1, %c0_64] : memref<2x32xf32, #tpu.memory_space<vmem>>, vector<1x32xf32>
      %cst_65 = arith.constant dense<0.000000e+00> : vector<16xf32>
      %182 = vector.multi_reduction <add>, %175, %cst_65 [1] : vector<16x32xf32> to vector<16xf32>
      %183 = vector.shape_cast %182 : vector<16xf32> to vector<16x1xf32>
      %cst_66 = arith.constant 3.200000e+01 : f32
      %184 = vector.broadcast %cst_66 : f32 to vector<16x1xf32>
      %185 = arith.divf %183, %184 : vector<16x1xf32>
      %186 = vector.broadcast %185 : vector<16x1xf32> to vector<16x32xf32>
      %187 = arith.subf %175, %186 : vector<16x32xf32>
      %188 = arith.mulf %187, %187 : vector<16x32xf32>
      %cst_67 = arith.constant dense<0.000000e+00> : vector<16xf32>
      %189 = vector.multi_reduction <add>, %188, %cst_67 [1] : vector<16x32xf32> to vector<16xf32>
      %190 = vector.shape_cast %189 : vector<16xf32> to vector<16x1xf32>
      %cst_68 = arith.constant 3.200000e+01 : f32
      %191 = vector.broadcast %cst_68 : f32 to vector<16x1xf32>
      %192 = arith.divf %190, %191 : vector<16x1xf32>
      %193 = vector.broadcast %185 : vector<16x1xf32> to vector<16x32xf32>
      %194 = arith.subf %175, %193 : vector<16x32xf32>
      %cst_69 = arith.constant 9.99999974E-6 : f32
      %195 = vector.broadcast %cst_69 : f32 to vector<16x1xf32>
      %196 = arith.addf %192, %195 : vector<16x1xf32>
      %197 = math.rsqrt %196 : vector<16x1xf32>
      %198 = vector.broadcast %197 : vector<16x1xf32> to vector<16x32xf32>
      %199 = arith.mulf %194, %198 : vector<16x32xf32>
      %200 = vector.broadcast %180 : vector<1x32xf32> to vector<16x32xf32>
      %201 = arith.mulf %199, %200 : vector<16x32xf32>
      %202 = vector.broadcast %181 : vector<1x32xf32> to vector<16x32xf32>
      %203 = arith.addf %201, %202 : vector<16x32xf32>
      %204 = arith.truncf %203 : vector<16x32xf32> to vector<16x32xbf16>
      %c0_70 = arith.constant 0 : index
      %c0_71 = arith.constant 0 : index
      %205 = vector.load %arg10[%c0_70, %c0_71] : memref<32x128xbf16, #tpu.memory_space<vmem>>, vector<32x128xbf16>
      %cst_72 = arith.constant dense<0.000000e+00> : vector<16x128xf32>
      %206 = tpu.matmul %204, %205, %cst_72 {dimension_numbers = #tpu.dot_dimension_numbers<[1], [0], [0], [1], [0, 0, 1, 1], [], []>} : vector<16x32xbf16>, vector<32x128xbf16>, vector<16x128xf32> -> vector<16x128xf32>
      %c0_73 = arith.constant 0 : index
      %c0_74 = arith.constant 0 : index
      %207 = vector.load %arg11[%c0_73, %c0_74] : memref<16x128xf32, #tpu.memory_space<vmem>>, vector<16x128xf32>
      tpu.vector_store %arg11[%c0_73, %c0_74], %206 {strides = array<i32>} : memref<16x128xf32, #tpu.memory_space<vmem>>, vector<16x128xf32>,
    } else {
    }
    return
  }
  func.func @transform_0(%arg0: i32) -> (i32, i32) {
    %c0_i32 = arith.constant 0 : i32
    %c0_i32_0 = arith.constant 0 : i32
    %c0_i32_1 = arith.constant 0 : i32
    return %c0_i32, %c0_i32_0 : i32, i32
  }
  func.func @transform_1(%arg0: i32) -> (i32, i32) {
    %c0_i32 = arith.constant 0 : i32
    %c0_i32_0 = arith.constant 0 : i32
    %c0_i32_1 = arith.constant 0 : i32
    return %c0_i32, %c0_i32_0 : i32, i32
  }
  func.func @transform_2(%arg0: i32) -> (i32, i32, i32) {
    %c0_i32 = arith.constant 0 : i32
    %c0_i32_0 = arith.constant 0 : i32
    %c0_i32_1 = arith.constant 0 : i32
    return %arg0, %c0_i32, %c0_i32_0 : i32, i32, i32
  }
  func.func @transform_3(%arg0: i32) -> (i32, i32, i32) {
    %c0_i32 = arith.constant 0 : i32
    %c0_i32_0 = arith.constant 0 : i32
    %c0_i32_1 = arith.constant 0 : i32
    return %arg0, %c0_i32, %c0_i32_0 : i32, i32, i32
  }
  func.func @transform_4(%arg0: i32) -> (i32, i32, i32) {
    %c0_i32 = arith.constant 0 : i32
    %c0_i32_0 = arith.constant 0 : i32
    %c0_i32_1 = arith.constant 0 : i32
    return %arg0, %c0_i32, %c0_i32_0 : i32, i32, i32
  }
  func.func @transform_5(%arg0: i32) -> (i32, i32, i32) {
    %c0_i32 = arith.constant 0 : i32
    %c0_i32_0 = arith.constant 0 : i32
    %c0_i32_1 = arith.constant 0 : i32
    return %arg0, %c0_i32, %c0_i32_0 : i32, i32, i32
  }
  func.func @transform_6(%arg0: i32) -> (i32, i32, i32) {
    %c0_i32 = arith.constant 0 : i32
    %c0_i32_0 = arith.constant 0 : i32
    %c0_i32_1 = arith.constant 0 : i32
    return %arg0, %c0_i32, %c0_i32_0 : i32, i32, i32
  }
  func.func @transform_7(%arg0: i32) -> (i32, i32, i32) {
    %c0_i32 = arith.constant 0 : i32
    %c0_i32_0 = arith.constant 0 : i32
    %c0_i32_1 = arith.constant 0 : i32
    return %arg0, %c0_i32, %c0_i32_0 : i32, i32, i32
  }
  func.func @transform_8(%arg0: i32) -> (i32, i32) {
    %c0_i32 = arith.constant 0 : i32
    %c0_i32_0 = arith.constant 0 : i32
    %c0_i32_1 = arith.constant 0 : i32
    return %c0_i32, %c0_i32_0 : i32, i32
  }
  func.func @transform_9(%arg0: i32) -> (i32, i32) {
    %c0_i32 = arith.constant 0 : i32
    %c0_i32_0 = arith.constant 0 : i32
    %c0_i32_1 = arith.constant 0 : i32
    return %c0_i32, %c0_i32_0 : i32, i32
  }
  func.func @transform_10(%arg0: i32) -> (i32, i32) {
    %c0_i32 = arith.constant 0 : i32
    %c0_i32_0 = arith.constant 0 : i32
    %c0_i32_1 = arith.constant 0 : i32
    return %c0_i32, %c0_i32_0 : i32, i32
  }
}

</mosaic_0001>

<llo_original>
// kernel: tpu_custom_call.1
$region0: #{tpu_custom_call.1}
  #allocation0 [shape = 'u32[]', space=smem, size = 0x4, offset = 0x4, fixed_abs, tag = 'smem constant byte address 0x4 - core index']
  #allocation1 [shape = 'u32[144,128]{1,0:T(1,128)}', space=vmem, size = 0x12000, scoped, tag = 'internal scratch']
  #allocation2 [shape = 'f32[16,32]{1,0:T(8,128)}', space=vmem, size = 0x2000, scoped, tag = 'scratch operand']
  %s0 = inlined_call_operand.vmem [shape: f32[16,32], index: 0, kind: input, shape index: {}]
  %s1 = inlined_call_operand.vmem [shape: f32[16,16], index: 1, kind: input, shape index: {}]
  %s2 = inlined_call_operand.vmem [shape: bf16[2,32,96], index: 2, kind: input, shape index: {}]
  %s3 = inlined_call_operand.vmem [shape: bf16[2,32,32], index: 3, kind: input, shape index: {}]
  %s4 = inlined_call_operand.vmem [shape: bf16[2,32,128], index: 4, kind: input, shape index: {}]
  %s5 = inlined_call_operand.vmem [shape: bf16[2,128,32], index: 5, kind: input, shape index: {}]
  %s6 = inlined_call_operand.vmem [shape: f32[2,8,32], index: 6, kind: input, shape index: {}]
  %s7 = inlined_call_operand.vmem [shape: f32[2,1,128], index: 7, kind: input, shape index: {}]
  %s8 = inlined_call_operand.vmem [shape: f32[2,32], index: 8, kind: input, shape index: {}]
  %s9 = inlined_call_operand.vmem [shape: bf16[32,128], index: 9, kind: input, shape index: {}]
  %s10 = inlined_call_operand.hbm [shape: f32[16,128], index: 10, kind: output, shape index: {}]
  %s11 = sld [smem:[#allocation0]]
  $region81: #{tpu_custom_call.1} parent=0
    _
  %s13 = ssub.s32 1, %s11
  %s14 = scalar_select 0, %s13, %s11
  $region1: #{tpu_custom_call.1} parent=0
    #allocation3 [shape = 'u8[8192]{0}', space=vmem, size = 0x2000, scoped, tag = 'output window, operand 0, single buffered']
    #allocation4 [shape = 's32[2]{0}', space=sflag, size = 0x8, scoped, tag = 'scoped memory for tpu_custom_call.1']
    %15 = vsyncpa [#allocation4], 0
    loop: start=0, step=1, limit=4
    $region2: #{tpu_custom_call.1} parent=1 // loop_pre_header
      _
    $region3: #{tpu_custom_call.1} parent=1 // loop_header
      %s17 = sphi 0, %s21
      %p18 = scmp.ge.s32.totalorder %s17, 4
      %s25 = sphi 0, %s25
      %s27 = sphi 0, %s25
      %s28 = sphi 0, %s27
      %s42 = sphi 0, %s28
      %s46 = sphi 0, %s46
      %s48 = sphi 0, %s46
      %s49 = sphi 0, %s48
      %s63 = sphi 0, %s49
      %s69 = sphi 0, %s71
      %s72 = sphi 0, %s69
      %s73 = sphi 0, %s72
      %s89 = sphi 0, %s73
      %s95 = sphi 0, %s97
      %s98 = sphi 0, %s95
      %s99 = sphi 0, %s98
      %s115 = sphi 0, %s99
      %s121 = sphi 0, %s123
      %s124 = sphi 0, %s121
      %s125 = sphi 0, %s124
      %s141 = sphi 0, %s125
      %s147 = sphi 0, %s149
      %s150 = sphi 0, %s147
      %s151 = sphi 0, %s150
      %s167 = sphi 0, %s151
      %s173 = sphi 0, %s175
      %s176 = sphi 0, %s173
      %s177 = sphi 0, %s176
      %s193 = sphi 0, %s177
      %s199 = sphi 0, %s201
      %s202 = sphi 0, %s199
      %s203 = sphi 0, %s202
      %s219 = sphi 0, %s203
      %s223 = sphi 0, %s223
      %s225 = sphi 0, %s223
      %s226 = sphi 0, %s225
      %s240 = sphi 0, %s226
      %s244 = sphi 0, %s244
      %s246 = sphi 0, %s244
      %s247 = sphi 0, %s246
      %s261 = sphi 0, %s247
      %s265 = sphi 0, %s265
      %s267 = sphi 0, %s265
      %s268 = sphi 0, %s267
      %s282 = sphi 0, %s268
    $region4: #{tpu_custom_call.1} parent=1 // loop_header_branch
      %20 = sbr.rel (%p18) target = $region8
    $region5: #{tpu_custom_call.1} parent=1 // loop_body
      %s22 = ssub.s32 %s17, 1
      %s23 = ssub.s32 %s17, 2
      %s24 = sadd.s32 %s17, 1
      %s26 = sadd.s32 %s25, 1
      %p29 = scmp.eq.s32.totalorder %s17, 1
      %p30 = scmp.ne.s32.totalorder %s25, %s27
      %p31 = scmp.eq.s32.totalorder %s17, 0
      %p32 = por %p30, %p31
      %p33 = scmp.ne.s32.totalorder %s25, %s27
      %p34 = scmp.eq.s32.totalorder %s22, 1
      %p35 = por %p33, %p34
      %p36 = scmp.ne.s32.totalorder %s27, %s28
      %p37 = scmp.eq.s32.totalorder %s22, 0
      %p38 = por %p36, %p37
      %p39 = scmp.ne.s32.totalorder %s27, %s28
      %p40 = scmp.eq.s32.totalorder %s23, 1
      %p41 = por %p39, %p40
      %p43 = scmp.ne.s32.totalorder %s28, %s42
      %p44 = scmp.eq.s32.totalorder %s23, 0
      %p45 = por %p43, %p44
      %s47 = sadd.s32 %s46, 1
      %p50 = scmp.eq.s32.totalorder %s17, 1
      %p51 = scmp.ne.s32.totalorder %s46, %s48
      %p52 = scmp.eq.s32.totalorder %s17, 0
      %p53 = por %p51, %p52
      %p54 = scmp.ne.s32.totalorder %s46, %s48
      %p55 = scmp.eq.s32.totalorder %s22, 1
      %p56 = por %p54, %p55
      %p57 = scmp.ne.s32.totalorder %s48, %s49
      %p58 = scmp.eq.s32.totalorder %s22, 0
      %p59 = por %p57, %p58
      %p60 = scmp.ne.s32.totalorder %s48, %s49
      %p61 = scmp.eq.s32.totalorder %s23, 1
      %p62 = por %p60, %p61
      %p64 = scmp.ne.s32.totalorder %s49, %s63
      %p65 = scmp.eq.s32.totalorder %s23, 0
      %p66 = por %p64, %p65
      %s67 = ssub.s32 %s17, %s24
      %p68 = scmp.eq.s32.totalorder %s67, 0
      %s70 = sadd.s32 %s69, 1
      %s71 = scalar_select %p68, %s69, %s70
      %p74 = pneg %p68
      %p75 = scmp.eq.s32.totalorder %s17, 1
      %p76 = por %p74, %p75
      %p77 = scmp.ne.s32.totalorder %s69, %s72
      %p78 = scmp.eq.s32.totalorder %s17, 0
      %p79 = por %p77, %p78
      %p80 = scmp.ne.s32.totalorder %s69, %s72
      %p81 = scmp.eq.s32.totalorder %s22, 1
      %p82 = por %p80, %p81
      %p83 = scmp.ne.s32.totalorder %s72, %s73
      %p84 = scmp.eq.s32.totalorder %s22, 0
      %p85 = por %p83, %p84
      %p86 = scmp.ne.s32.totalorder %s72, %s73
      %p87 = scmp.eq.s32.totalorder %s23, 1
      %p88 = por %p86, %p87
      %p90 = scmp.ne.s32.totalorder %s73, %s89
      %p91 = scmp.eq.s32.totalorder %s23, 0
      %p92 = por %p90, %p91
      %s93 = ssub.s32 %s17, %s24
      %p94 = scmp.eq.s32.totalorder %s93, 0
      %s96 = sadd.s32 %s95, 1
      %s97 = scalar_select %p94, %s95, %s96
      %p100 = pneg %p94
      %p101 = scmp.eq.s32.totalorder %s17, 1
      %p102 = por %p100, %p101
      %p103 = scmp.ne.s32.totalorder %s95, %s98
      %p104 = scmp.eq.s32.totalorder %s17, 0
      %p105 = por %p103, %p104
      %p106 = scmp.ne.s32.totalorder %s95, %s98
      %p107 = scmp.eq.s32.totalorder %s22, 1
      %p108 = por %p106, %p107
      %p109 = scmp.ne.s32.totalorder %s98, %s99
      %p110 = scmp.eq.s32.totalorder %s22, 0
      %p111 = por %p109, %p110
      %p112 = scmp.ne.s32.totalorder %s98, %s99
      %p113 = scmp.eq.s32.totalorder %s23, 1
      %p114 = por %p112, %p113
      %p116 = scmp.ne.s32.totalorder %s99, %s115
      %p117 = scmp.eq.s32.totalorder %s23, 0
      %p118 = por %p116, %p117
      %s119 = ssub.s32 %s17, %s24
      %p120 = scmp.eq.s32.totalorder %s119, 0
      %s122 = sadd.s32 %s121, 1
      %s123 = scalar_select %p120, %s121, %s122
      %p126 = pneg %p120
      %p127 = scmp.eq.s32.totalorder %s17, 1
      %p128 = por %p126, %p127
      %p129 = scmp.ne.s32.totalorder %s121, %s124
      %p130 = scmp.eq.s32.totalorder %s17, 0
      %p131 = por %p129, %p130
      %p132 = scmp.ne.s32.totalorder %s121, %s124
      %p133 = scmp.eq.s32.totalorder %s22, 1
      %p134 = por %p132, %p133
      %p135 = scmp.ne.s32.totalorder %s124, %s125
      %p136 = scmp.eq.s32.totalorder %s22, 0
      %p137 = por %p135, %p136
      %p138 = scmp.ne.s32.totalorder %s124, %s125
      %p139 = scmp.eq.s32.totalorder %s23, 1
      %p140 = por %p138, %p139
      %p142 = scmp.ne.s32.totalorder %s125, %s141
      %p143 = scmp.eq.s32.totalorder %s23, 0
      %p144 = por %p142, %p143
      %s145 = ssub.s32 %s17, %s24
      %p146 = scmp.eq.s32.totalorder %s145, 0
      %s148 = sadd.s32 %s147, 1
      %s149 = scalar_select %p146, %s147, %s148
      %p152 = pneg %p146
      %p153 = scmp.eq.s32.totalorder %s17, 1
      %p154 = por %p152, %p153
      %p155 = scmp.ne.s32.totalorder %s147, %s150
      %p156 = scmp.eq.s32.totalorder %s17, 0
      %p157 = por %p155, %p156
      %p158 = scmp.ne.s32.totalorder %s147, %s150
      %p159 = scmp.eq.s32.totalorder %s22, 1
      %p160 = por %p158, %p159
      %p161 = scmp.ne.s32.totalorder %s150, %s151
      %p162 = scmp.eq.s32.totalorder %s22, 0
      %p163 = por %p161, %p162
      %p164 = scmp.ne.s32.totalorder %s150, %s151
      %p165 = scmp.eq.s32.totalorder %s23, 1
      %p166 = por %p164, %p165
      %p168 = scmp.ne.s32.totalorder %s151, %s167
      %p169 = scmp.eq.s32.totalorder %s23, 0
      %p170 = por %p168, %p169
      %s171 = ssub.s32 %s17, %s24
      %p172 = scmp.eq.s32.totalorder %s171, 0
      %s174 = sadd.s32 %s173, 1
      %s175 = scalar_select %p172, %s173, %s174
      %p178 = pneg %p172
      %p179 = scmp.eq.s32.totalorder %s17, 1
      %p180 = por %p178, %p179
      %p181 = scmp.ne.s32.totalorder %s173, %s176
      %p182 = scmp.eq.s32.totalorder %s17, 0
      %p183 = por %p181, %p182
      %p184 = scmp.ne.s32.totalorder %s173, %s176
      %p185 = scmp.eq.s32.totalorder %s22, 1
      %p186 = por %p184, %p185
      %p187 = scmp.ne.s32.totalorder %s176, %s177
      %p188 = scmp.eq.s32.totalorder %s22, 0
      %p189 = por %p187, %p188
      %p190 = scmp.ne.s32.totalorder %s176, %s177
      %p191 = scmp.eq.s32.totalorder %s23, 1
      %p192 = por %p190, %p191
      %p194 = scmp.ne.s32.totalorder %s177, %s193
      %p195 = scmp.eq.s32.totalorder %s23, 0
      %p196 = por %p194, %p195
      %s197 = ssub.s32 %s17, %s24
      %p198 = scmp.eq.s32.totalorder %s197, 0
      %s200 = sadd.s32 %s199, 1
      %s201 = scalar_select %p198, %s199, %s200
      %p204 = pneg %p198
      %p205 = scmp.eq.s32.totalorder %s17, 1
      %p206 = por %p204, %p205
      %p207 = scmp.ne.s32.totalorder %s199, %s202
      %p208 = scmp.eq.s32.totalorder %s17, 0
      %p209 = por %p207, %p208
      %p210 = scmp.ne.s32.totalorder %s199, %s202
      %p211 = scmp.eq.s32.totalorder %s22, 1
      %p212 = por %p210, %p211
      %p213 = scmp.ne.s32.totalorder %s202, %s203
      %p214 = scmp.eq.s32.totalorder %s22, 0
      %p215 = por %p213, %p214
      %p216 = scmp.ne.s32.totalorder %s202, %s203
      %p217 = scmp.eq.s32.totalorder %s23, 1
      %p218 = por %p216, %p217
      %p220 = scmp.ne.s32.totalorder %s203, %s219
      %p221 = scmp.eq.s32.totalorder %s23, 0
      %p222 = por %p220, %p221
      %s224 = sadd.s32 %s223, 1
      %p227 = scmp.eq.s32.totalorder %s17, 1
      %p228 = scmp.ne.s32.totalorder %s223, %s225
      %p229 = scmp.eq.s32.totalorder %s17, 0
      %p230 = por %p228, %p229
      %p231 = scmp.ne.s32.totalorder %s223, %s225
      %p232 = scmp.eq.s32.totalorder %s22, 1
      %p233 = por %p231, %p232
      %p234 = scmp.ne.s32.totalorder %s225, %s226
      %p235 = scmp.eq.s32.totalorder %s22, 0
      %p236 = por %p234, %p235
      %p237 = scmp.ne.s32.totalorder %s225, %s226
      %p238 = scmp.eq.s32.totalorder %s23, 1
      %p239 = por %p237, %p238
      %p241 = scmp.ne.s32.totalorder %s226, %s240
      %p242 = scmp.eq.s32.totalorder %s23, 0
      %p243 = por %p241, %p242
      %s245 = sadd.s32 %s244, 1
      %p248 = scmp.eq.s32.totalorder %s17, 1
      %p249 = scmp.ne.s32.totalorder %s244, %s246
      %p250 = scmp.eq.s32.totalorder %s17, 0
      %p251 = por %p249, %p250
      %p252 = scmp.ne.s32.totalorder %s244, %s246
      %p253 = scmp.eq.s32.totalorder %s22, 1
      %p254 = por %p252, %p253
      %p255 = scmp.ne.s32.totalorder %s246, %s247
      %p256 = scmp.eq.s32.totalorder %s22, 0
      %p257 = por %p255, %p256
      %p258 = scmp.ne.s32.totalorder %s246, %s247
      %p259 = scmp.eq.s32.totalorder %s23, 1
      %p260 = por %p258, %p259
      %p262 = scmp.ne.s32.totalorder %s247, %s261
      %p263 = scmp.eq.s32.totalorder %s23, 0
      %p264 = por %p262, %p263
      %s266 = sadd.s32 %s265, 1
      %p269 = scmp.eq.s32.totalorder %s17, 1
      %p270 = scmp.ne.s32.totalorder %s265, %s267
      %p271 = scmp.eq.s32.totalorder %s17, 0
      %p272 = por %p270, %p271
      %p273 = scmp.ne.s32.totalorder %s265, %s267
      %p274 = scmp.eq.s32.totalorder %s22, 1
      %p275 = por %p273, %p274
      %p276 = scmp.ne.s32.totalorder %s267, %s268
      %p277 = scmp.eq.s32.totalorder %s22, 0
      %p278 = por %p276, %p277
      %p279 = scmp.ne.s32.totalorder %s267, %s268
      %p280 = scmp.eq.s32.totalorder %s23, 1
      %p281 = por %p279, %p280
      %p283 = scmp.ne.s32.totalorder %s268, %s282
      %p284 = scmp.eq.s32.totalorder %s23, 0
      %p285 = por %p283, %p284
      %p286 = scmp.le.s32.totalorder 1, %s17
      %p287 = scmp.lt.s32.totalorder %s17, 3
      %p288 = pnand %p286, %p287
      %p289 = pneg %p288
      // Predicated region
      $region9: #{tpu_custom_call.1} parent=5 // pred_check
        _
      $region10: #{tpu_custom_call.1} parent=5 // pred_check_branch
        %291 = sbr.rel (%p288) target = $region12
      $region11: #{tpu_custom_call.1} parent=5 // pred_region
        %s292 = ssub.s32 %s17, 1
        // Predicated region
        $region13: #{tpu_custom_call.1} parent=11 // pred_check
          %p293 = pneg %p38
        $region14: #{tpu_custom_call.1} parent=11 // pred_check_branch
          %295 = sbr.rel (%p293) target = $region16
        $region15: #{tpu_custom_call.1} parent=11 // pred_region
          _
        $region16: #{tpu_custom_call.1} parent=11 // pred_fallthru
          _
        // Predicated region
        $region17: #{tpu_custom_call.1} parent=11 // pred_check
          %p296 = pneg %p59
        $region18: #{tpu_custom_call.1} parent=11 // pred_check_branch
          %298 = sbr.rel (%p296) target = $region20
        $region19: #{tpu_custom_call.1} parent=11 // pred_region
          _
        $region20: #{tpu_custom_call.1} parent=11 // pred_fallthru
          _
        // Predicated region
        $region21: #{tpu_custom_call.1} parent=11 // pred_check
          %p299 = pneg %p236
        $region22: #{tpu_custom_call.1} parent=11 // pred_check_branch
          %301 = sbr.rel (%p299) target = $region24
        $region23: #{tpu_custom_call.1} parent=11 // pred_region
          _
        $region24: #{tpu_custom_call.1} parent=11 // pred_fallthru
          _
        // Predicated region
        $region25: #{tpu_custom_call.1} parent=11 // pred_check
          %p302 = pneg %p257
        $region26: #{tpu_custom_call.1} parent=11 // pred_check_branch
          %304 = sbr.rel (%p302) target = $region28
        $region27: #{tpu_custom_call.1} parent=11 // pred_region
          _
        $region28: #{tpu_custom_call.1} parent=11 // pred_fallthru
          _
      $region12: #{tpu_custom_call.1} parent=5 // pred_fallthru
        _
      %p305 = scmp.lt.s32.totalorder %s17, 2
      // Predicated region
      $region29: #{tpu_custom_call.1} parent=5 // pred_check
        %p306 = pneg %p305
      $region30: #{tpu_custom_call.1} parent=5 // pred_check_branch
        %308 = sbr.rel (%p306) target = $region32
      $region31: #{tpu_custom_call.1} parent=5 // pred_region
        // Predicated region
        $region33: #{tpu_custom_call.1} parent=31 // pred_check
          %p309 = pneg %p79
        $region34: #{tpu_custom_call.1} parent=31 // pred_check_branch
          %311 = sbr.rel (%p309) target = $region36
        $region35: #{tpu_custom_call.1} parent=31 // pred_region
          %p312 = scmp.lt.s32.totalorder %s17, 1
          %s313 = scalar_select %p312, %s17, 1
          %s314 = smul.addr %s313, 4
          %s315 = smul.addr %s314, 4
          %s316 = scalar_lea.vmem %s2, %s315
        $region36: #{tpu_custom_call.1} parent=31 // pred_fallthru
          _
        // Predicated region
        $region37: #{tpu_custom_call.1} parent=31 // pred_check
          %p317 = pneg %p105
        $region38: #{tpu_custom_call.1} parent=31 // pred_check_branch
          %319 = sbr.rel (%p317) target = $region40
        $region39: #{tpu_custom_call.1} parent=31 // pred_region
          %p320 = scmp.lt.s32.totalorder %s17, 1
          %s321 = scalar_select %p320, %s17, 1
          %s322 = smul.addr %s321, 4
          %s323 = smul.addr %s322, 4
          %s324 = scalar_lea.vmem %s3, %s323
        $region40: #{tpu_custom_call.1} parent=31 // pred_fallthru
          _
        // Predicated region
        $region41: #{tpu_custom_call.1} parent=31 // pred_check
          %p325 = pneg %p131
        $region42: #{tpu_custom_call.1} parent=31 // pred_check_branch
          %327 = sbr.rel (%p325) target = $region44
        $region43: #{tpu_custom_call.1} parent=31 // pred_region
          %p328 = scmp.lt.s32.totalorder %s17, 1
          %s329 = scalar_select %p328, %s17, 1
          %s330 = smul.addr %s329, 4
          %s331 = smul.addr %s330, 4
          %s332 = scalar_lea.vmem %s4, %s331
        $region44: #{tpu_custom_call.1} parent=31 // pred_fallthru
          _
        // Predicated region
        $region45: #{tpu_custom_call.1} parent=31 // pred_check
          %p333 = pneg %p157
        $region46: #{tpu_custom_call.1} parent=31 // pred_check_branch
          %335 = sbr.rel (%p333) target = $region48
        $region47: #{tpu_custom_call.1} parent=31 // pred_region
          %p336 = scmp.lt.s32.totalorder %s17, 1
          %s337 = scalar_select %p336, %s17, 1
          %s338 = smul.addr %s337, 16
          %s339 = smul.addr %s338, 4
          %s340 = scalar_lea.vmem %s5, %s339
        $region48: #{tpu_custom_call.1} parent=31 // pred_fallthru
          _
        // Predicated region
        $region49: #{tpu_custom_call.1} parent=31 // pred_check
          %p341 = pneg %p183
        $region50: #{tpu_custom_call.1} parent=31 // pred_check_branch
          %343 = sbr.rel (%p341) target = $region52
        $region51: #{tpu_custom_call.1} parent=31 // pred_region
          %p344 = scmp.lt.s32.totalorder %s17, 1
          %s345 = scalar_select %p344, %s17, 1
          %s346 = smul.addr %s345, 8
          %s347 = scalar_lea.vmem %s6, %s346
        $region52: #{tpu_custom_call.1} parent=31 // pred_fallthru
          _
        // Predicated region
        $region53: #{tpu_custom_call.1} parent=31 // pred_check
          %p348 = pneg %p209
        $region54: #{tpu_custom_call.1} parent=31 // pred_check_branch
          %350 = sbr.rel (%p348) target = $region56
        $region55: #{tpu_custom_call.1} parent=31 // pred_region
          %p351 = scmp.lt.s32.totalorder %s17, 1
          %s352 = scalar_select %p351, %s17, 1
          %s353 = scalar_lea.vmem %s7, %s352
        $region56: #{tpu_custom_call.1} parent=31 // pred_fallthru
          _
      $region32: #{tpu_custom_call.1} parent=5 // pred_fallthru
        _
      %p354 = scmp.le.s32.totalorder 1, %s17
      %p355 = scmp.lt.s32.totalorder %s17, 3
      %p356 = pnand %p354, %p355
      %p357 = pneg %p356
      // Predicated region
      $region57: #{tpu_custom_call.1} parent=5 // pred_check
        _
      $region58: #{tpu_custom_call.1} parent=5 // pred_check_branch
        %359 = sbr.rel (%p356) target = $region60
      $region59: #{tpu_custom_call.1} parent=5 // pred_region
        %s360 = ssub.s32 %s17, 1
        %p361 = pneg %p38
        %p362 = pneg %p35
        %p363 = pneg %p59
        %p364 = pneg %p56
        %p365 = scmp.lt.s32.totalorder %s22, 1
        %s366 = scalar_select %p365, %s22, 1
        %s367 = smul.addr %s366, 4
        %s368 = smul.addr %s367, 4
        %s369 = scalar_lea.vmem %s2, %s368
        %p370 = pneg %p85
        %p371 = pneg %p82
        %p372 = scmp.lt.s32.totalorder %s22, 1
        %s373 = scalar_select %p372, %s22, 1
        %s374 = smul.addr %s373, 4
        %s375 = smul.addr %s374, 4
        %s376 = scalar_lea.vmem %s3, %s375
        %p377 = pneg %p111
        %p378 = pneg %p108
        %p379 = scmp.lt.s32.totalorder %s22, 1
        %s380 = scalar_select %p379, %s22, 1
        %s381 = smul.addr %s380, 4
        %s382 = smul.addr %s381, 4
        %s383 = scalar_lea.vmem %s4, %s382
        %p384 = pneg %p137
        %p385 = pneg %p134
        %p386 = scmp.lt.s32.totalorder %s22, 1
        %s387 = scalar_select %p386, %s22, 1
        %s388 = smul.addr %s387, 16
        %s389 = smul.addr %s388, 4
        %s390 = scalar_lea.vmem %s5, %s389
        %p391 = pneg %p163
        %p392 = pneg %p160
        %p393 = scmp.lt.s32.totalorder %s22, 1
        %s394 = scalar_select %p393, %s22, 1
        %s395 = smul.addr %s394, 8
        %s396 = scalar_lea.vmem %s6, %s395
        %p397 = pneg %p189
        %p398 = pneg %p186
        %p399 = scmp.lt.s32.totalorder %s22, 1
        %s400 = scalar_select %p399, %s22, 1
        %s401 = scalar_lea.vmem %s7, %s400
        %p402 = pneg %p215
        %p403 = pneg %p212
        %p404 = pneg %p236
        %p405 = pneg %p233
        %p406 = pneg %p257
        %p407 = pneg %p254
        %p408 = pneg %p278
        %p409 = pneg %p275
        %p410 = scmp.lt.s32.totalorder %s22, 1
        %s411 = scalar_select %p410, %s22, 1
        %s412 = smul.addr %s411, 4
        %s413 = smul.addr %s412, 4
        %s414 = scalar_lea.vmem %s2, %s413
        %p415 = scmp.lt.s32.totalorder %s22, 1
        %s416 = scalar_select %p415, %s22, 1
        %s417 = smul.addr %s416, 4
        %s418 = smul.addr %s417, 4
        %s419 = scalar_lea.vmem %s3, %s418
        %p420 = scmp.lt.s32.totalorder %s22, 1
        %s421 = scalar_select %p420, %s22, 1
        %s422 = smul.addr %s421, 4
        %s423 = smul.addr %s422, 4
        %s424 = scalar_lea.vmem %s4, %s423
        %p425 = scmp.lt.s32.totalorder %s22, 1
        %s426 = scalar_select %p425, %s22, 1
        %s427 = smul.addr %s426, 16
        %s428 = smul.addr %s427, 4
        %s429 = scalar_lea.vmem %s5, %s428
        %p430 = scmp.lt.s32.totalorder %s22, 1
        %s431 = scalar_select %p430, %s22, 1
        %s432 = smul.addr %s431, 8
        %s433 = scalar_lea.vmem %s6, %s432
        %p434 = scmp.lt.s32.totalorder %s22, 1
        %s435 = scalar_select %p434, %s22, 1
        %s436 = scalar_lea.vmem %s7, %s435
        %p438 = scmp.eq.s32.totalorder %s22, 0
        // Predicated region
        $region61: #{tpu_custom_call.1} parent=59 // pred_check
          %p439 = pneg %p438
        $region62: #{tpu_custom_call.1} parent=59 // pred_check_branch
          %441 = sbr.rel (%p439) target = $region64
        $region63: #{tpu_custom_call.1} parent=59 // pred_region
          %v442 = vld [vmem:[%s0] sm:$0xff]
          %v443 = vld [vmem:[%s0 + $0x8] sm:$0xff]
          %vm444 = vcmask 261120
          %445 = vst.msk [vmem:[#allocation2] sm:$0xff] %vm444, %v442
          %446 = vst.msk [vmem:[#allocation2 + $0x8] sm:$0xff] %vm444, %v443
        $region64: #{tpu_custom_call.1} parent=59 // pred_fallthru
          _
        %v447 = vld [vmem:[#allocation2] sm:$0xff]
        %v448 = vld [vmem:[#allocation2 + $0x8] sm:$0xff]
        %v449 = vld [vmem:[%s433] sm:$0xff]
        %vm450 = vcmask 261120
        %v451 = vsel %vm450, %v447, 0.0
        %452 = vadd.xlane.f32.xlu0 %v451
        %v453 = vpop.xlane.xlu0 %452
        %v454 = vsel %vm450, %v448, 0.0
        %455 = vadd.xlane.f32.xlu0 %v454
        %v456 = vpop.xlane.xlu0 %455
        %v457 = vrcp.pop 32.0
        %v458 = vmul.f32 %v453, %v457
        %v459 = vmul.f32 %v456, %v457
        %v460 = vsub.f32 %v447, %v458
        %v461 = vsub.f32 %v448, %v459
        %v462 = vmul.f32 %v460, %v460
        %v463 = vmul.f32 %v461, %v461
        %v464 = vsel %vm450, %v462, 0.0
        %465 = vadd.xlane.f32.xlu0 %v464
        %v466 = vpop.xlane.xlu0 %465
        %v467 = vsel %vm450, %v463, 0.0
        %468 = vadd.xlane.f32.xlu0 %v467
        %v469 = vpop.xlane.xlu0 %468
        %v470 = vmul.f32 %v466, %v457
        %v471 = vmul.f32 %v469, %v457
        %v472 = vadd.f32 %v470, 1e-05
        %v473 = vadd.f32 %v471, 1e-05
        %v474 = vrsqrt.pop %v472
        %v475 = vrsqrt.pop %v473
        %v476 = vmul.f32 %v460, %v474
        %v477 = vmul.f32 %v461, %v475
        %v478 = vlaneseq
        %v479 = vshrl.u32 %v478, 7
        %v480 = vsub.s32 0, %v479
        %v481 = vrot.slane %v449, %v480
        %v482 = vmul.f32 %v476, %v481
        %v483 = vmul.f32 %v477, %v481
        %v484 = vlaneseq
        %v485 = vshrl.u32 %v484, 7
        %v486 = vsub.s32 1, %v485
        %v487 = vrot.slane %v449, %v486
        %v488 = vadd.f32 %v482, %v487
        %v489 = vadd.f32 %v483, %v487
        %v490 = vpack.c.bf16 %v489, %v488
        %v491 = vld [vmem:[%s414] sm:$0xf]
        %v492 = vld [vmem:[%s414 + $0x4] sm:$0xf]
        %v493 = vld [vmem:[%s414 + $0x8] sm:$0xf]
        %v494 = vld [vmem:[%s414 + $0xc] sm:$0xf]
        %v499 = vunpack.c.l.b16 %v491
        %v500 = vunpack.c.l.b16 %v492
        %v501 = vunpack.c.l.b16 %v493
        %v502 = vunpack.c.l.b16 %v494
        %v503 = vpack.c.b16 %v500, %v499
        %v504 = vpack.c.b16 %v502, %v501
        %v508 = vsel %vm450, %v490, 0
        %510 = vmatprep.subr.bf16.mxu0 0
        %511 = vmatpush1.bf16.msra.mxu0 0
        %512 = vmatprep.subr.bf16.mxu0 0
        %513 = vmatpush1.bf16.msra.mxu0 0
        %514 = vmatprep.subr.bf16.mxu0 0
        %515 = vmatpush1.bf16.msra.mxu0 0
        %516 = vmatprep.subr.bf16.mxu0 0
        %517 = vmatpush1.bf16.msra.mxu0 0
        %518 = vmatprep.subr.bf16.mxu0 0
        %519 = vmatpush1.bf16.msra.mxu0 0
        %520 = vmatprep.subr.bf16.mxu0 0
        %521 = vmatpush1.bf16.msra.mxu0 0
        %522 = vmatprep.subr.bf16.mxu0 0
        %523 = vmatpush1.bf16.msra.mxu0 %v504
        %524 = vmatprep.subr.bf16.mxu0 0
        %525 = vmatpush1.bf16.msra.mxu0 %v503
        %526 = vmatprep.subr.bf16.mxu0 0
        %527 = vmatpush2.bf16.msra.mxu0 0
        %528 = vmatprep.subr.bf16.mxu0 0
        %529 = vmatpush2.bf16.msra.mxu0 0
        %530 = vmatprep.subr.bf16.mxu0 0
        %531 = vmatpush2.bf16.msra.mxu0 0
        %532 = vmatprep.subr.bf16.mxu0 0
        %533 = vmatpush2.bf16.msra.mxu0 0
        %534 = vmatprep.subr.bf16.mxu0 0
        %535 = vmatpush2.bf16.msra.mxu0 0
        %536 = vmatprep.subr.bf16.mxu0 0
        %537 = vmatpush2.bf16.msra.mxu0 0
        %538 = vmatprep.subr.bf16.mxu0 0
        %539 = vmatpush2.bf16.msra.mxu0 0
        %540 = vmatprep.subr.bf16.mxu0 0
        %541 = vmatpush2.bf16.msra.mxu0 0
        %542 = vmatprep.mubr.bf16.mxu0 0
        %543 = vmatmul.mubr.bf16.gmra.mxu0 %v508
        %v544 = vpop.f32.mrf.mxu0
        %v545 = vadd.f32 0.0, %v544
        %v546 = vpop.f32.mrf.mxu0
        %v547 = vpop.f32.mrf.mxu0
        %v548 = vadd.f32 0.0, %v547
        %v549 = vpop.f32.mrf.mxu0
        %550 = vdwg.mxu0
        %v551 = vld [vmem:[%s1] sm:$0xff]
        %v552 = vld [vmem:[%s1 + $0x8] sm:$0xff]
        %555 = vrot.lane.b32.xlu0 %v545, 96
        %v556 = vpop.permute.xlu0 %555
        %557 = vrot.lane.b32.xlu0 %v548, 96
        %v558 = vpop.permute.xlu0 %557
        %vm559 = vcmask 64512
        %v560 = vsel %vm559, %v545, 0
        %v562 = vsel %vm559, %v548, 0
        %v564 = vsel %vm559, %v556, 0
        %v566 = vsel %vm559, %v558, 0
        %568 = vmatprep.subr.mxu0 0.0
        %569 = vmatpush1.xpose.msra.mxu0 0.0
        %570 = vmatprep.subr.mxu0 0.0
        %571 = vmatpush1.xpose.msra.mxu0 0.0
        %572 = vmatprep.subr.mxu0 0.0
        %573 = vmatpush1.xpose.msra.mxu0 0.0
        %574 = vmatprep.subr.mxu0 0.0
        %575 = vmatpush1.xpose.msra.mxu0 0.0
        %576 = vmatprep.subr.mxu0 0.0
        %577 = vmatpush1.xpose.msra.mxu0 0.0
        %578 = vmatprep.subr.mxu0 0.0
        %579 = vmatpush1.xpose.msra.mxu0 0.0
        %580 = vmatprep.subr.mxu0 0.0
        %581 = vmatpush1.xpose.msra.mxu0 0.0
        %582 = vmatprep.subr.mxu0 0.0
        %583 = vmatpush1.xpose.msra.mxu0 0.0
        %584 = vmatprep.subr.mxu0 0.0
        %585 = vmatpush1.xpose.msra.mxu0 0.0
        %586 = vmatprep.subr.mxu0 0.0
        %587 = vmatpush1.xpose.msra.mxu0 0.0
        %588 = vmatprep.subr.mxu0 0.0
        %589 = vmatpush1.xpose.msra.mxu0 0.0
        %590 = vmatprep.subr.mxu0 0.0
        %591 = vmatpush1.xpose.msra.mxu0 0.0
        %592 = vmatprep.subr.mxu0 0.0
        %593 = vmatpush1.xpose.msra.mxu0 0.0
        %594 = vmatprep.subr.mxu0 0.0
        %595 = vmatpush1.xpose.msra.mxu0 0.0
        %596 = vmatprep.subr.mxu0 0.0
        %597 = vmatpush1.xpose.msra.mxu0 %v566
        %598 = vmatprep.subr.mxu0 0.0
        %599 = vmatpush1.xpose.msra.mxu0 %v564
        %600 = vmatprep.subr.mxu0 0.0
        %601 = vmatpush2.xpose.msra.mxu0 0.0
        %602 = vmatprep.subr.mxu0 0.0
        %603 = vmatpush2.xpose.msra.mxu0 0.0
        %604 = vmatprep.subr.mxu0 0.0
        %605 = vmatpush2.xpose.msra.mxu0 0.0
        %606 = vmatprep.subr.mxu0 0.0
        %607 = vmatpush2.xpose.msra.mxu0 0.0
        %608 = vmatprep.subr.mxu0 0.0
        %609 = vmatpush2.xpose.msra.mxu0 0.0
        %610 = vmatprep.subr.mxu0 0.0
        %611 = vmatpush2.xpose.msra.mxu0 0.0
        %612 = vmatprep.subr.mxu0 0.0
        %613 = vmatpush2.xpose.msra.mxu0 0.0
        %614 = vmatprep.subr.mxu0 0.0
        %615 = vmatpush2.xpose.msra.mxu0 0.0
        %616 = vmatprep.subr.mxu0 0.0
        %617 = vmatpush2.xpose.msra.mxu0 0.0
        %618 = vmatprep.subr.mxu0 0.0
        %619 = vmatpush2.xpose.msra.mxu0 0.0
        %620 = vmatprep.subr.mxu0 0.0
        %621 = vmatpush2.xpose.msra.mxu0 0.0
        %622 = vmatprep.subr.mxu0 0.0
        %623 = vmatpush2.xpose.msra.mxu0 0.0
        %624 = vmatprep.subr.mxu0 0.0
        %625 = vmatpush2.xpose.msra.mxu0 0.0
        %626 = vmatprep.subr.mxu0 0.0
        %627 = vmatpush2.xpose.msra.mxu0 0.0
        %628 = vmatprep.subr.mxu0 0.0
        %629 = vmatpush2.xpose.msra.mxu0 0.0
        %630 = vmatprep.subr.mxu0 0.0
        %631 = vmatpush2.xpose.msra.mxu0 0.0
        %632 = vmatprep.mubr.f32.mxu0 0.0
        %633 = vmatmul.mubr.f32.gmra.mxu0 %v560
        %v634 = vpop.f32.mrf.mxu0
        %v635 = vadd.f32 0.0, %v634
        %v636 = vpop.f32.mrf.mxu0
        %637 = vmatprep.mubr.f32.mxu0 0.0
        %638 = vmatmul.mubr.f32.gmra.mxu0 %v562
        %v639 = vpop.f32.mrf.mxu0
        %v640 = vadd.f32 0.0, %v639
        %v641 = vpop.f32.mrf.mxu0
        %642 = vdwg.mxu0
        %v643 = vmul.f32 %v635, 0.35355338
        %v644 = vmul.f32 %v640, 0.35355338
        %v645 = vadd.f32 %v643, %v551
        %v646 = vadd.f32 %v644, %v552
        %vm647 = vcmask 130048
        %v648 = vsel %vm647, %v645, -inf
        %649 = vmax.xlane.f32.xlu0 %v648
        %v650 = vpop.xlane.xlu0 %649
        %v651 = vsel %vm647, %v646, -inf
        %652 = vmax.xlane.f32.xlu0 %v651
        %v653 = vpop.xlane.xlu0 %652
        %v654 = vsub.f32 %v645, %v650
        %v655 = vsub.f32 %v646, %v653
        %v656 = vmul.f32 %v654, 1.442695
        %v657 = vpow.pop %v656
        %v658 = vmul.f32 %v655, 1.442695
        %v659 = vpow.pop %v658
        %v660 = vsel %vm647, %v657, 0.0
        %661 = vadd.xlane.f32.xlu0 %v660
        %v662 = vpop.xlane.xlu0 %661
        %v663 = vsel %vm647, %v659, 0.0
        %664 = vadd.xlane.f32.xlu0 %v663
        %v665 = vpop.xlane.xlu0 %664
        %v666 = vrcp.pop %v662
        %v667 = vrcp.pop %v665
        %v668 = vmul.f32 %v657, %v666
        %v669 = vmul.f32 %v659, %v667
        %670 = vrot.lane.b32.xlu0 %v545, 64
        %v671 = vpop.permute.xlu0 %670
        %672 = vrot.lane.b32.xlu0 %v548, 64
        %v673 = vpop.permute.xlu0 %672
        %v677 = vsel %vm647, %v668, 0
        %v680 = vsel %vm647, %v669, 0
        %682 = vmatprep.subr.mxu0 0.0
        %683 = vmatpush1.msra.mxu0 0.0
        %684 = vmatprep.subr.mxu0 0.0
        %685 = vmatpush1.msra.mxu0 0.0
        %686 = vmatprep.subr.mxu0 0.0
        %687 = vmatpush1.msra.mxu0 0.0
        %688 = vmatprep.subr.mxu0 0.0
        %689 = vmatpush1.msra.mxu0 0.0
        %690 = vmatprep.subr.mxu0 0.0
        %691 = vmatpush1.msra.mxu0 0.0
        %692 = vmatprep.subr.mxu0 0.0
        %693 = vmatpush1.msra.mxu0 0.0
        %694 = vmatprep.subr.mxu0 0.0
        %695 = vmatpush1.msra.mxu0 0.0
        %696 = vmatprep.subr.mxu0 0.0
        %697 = vmatpush1.msra.mxu0 0.0
        %698 = vmatprep.subr.mxu0 0.0
        %699 = vmatpush1.msra.mxu0 0.0
        %700 = vmatprep.subr.mxu0 0.0
        %701 = vmatpush1.msra.mxu0 0.0
        %702 = vmatprep.subr.mxu0 0.0
        %703 = vmatpush1.msra.mxu0 0.0
        %704 = vmatprep.subr.mxu0 0.0
        %705 = vmatpush1.msra.mxu0 0.0
        %706 = vmatprep.subr.mxu0 0.0
        %707 = vmatpush1.msra.mxu0 0.0
        %708 = vmatprep.subr.mxu0 0.0
        %709 = vmatpush1.msra.mxu0 0.0
        %710 = vmatprep.subr.mxu0 0.0
        %711 = vmatpush1.msra.mxu0 %v673
        %712 = vmatprep.subr.mxu0 0.0
        %713 = vmatpush1.msra.mxu0 %v671
        %714 = vmatprep.subr.mxu0 0.0
        %715 = vmatpush2.msra.mxu0 0.0
        %716 = vmatprep.subr.mxu0 0.0
        %717 = vmatpush2.msra.mxu0 0.0
        %718 = vmatprep.subr.mxu0 0.0
        %719 = vmatpush2.msra.mxu0 0.0
        %720 = vmatprep.subr.mxu0 0.0
        %721 = vmatpush2.msra.mxu0 0.0
        %722 = vmatprep.subr.mxu0 0.0
        %723 = vmatpush2.msra.mxu0 0.0
        %724 = vmatprep.subr.mxu0 0.0
        %725 = vmatpush2.msra.mxu0 0.0
        %726 = vmatprep.subr.mxu0 0.0
        %727 = vmatpush2.msra.mxu0 0.0
        %728 = vmatprep.subr.mxu0 0.0
        %729 = vmatpush2.msra.mxu0 0.0
        %730 = vmatprep.subr.mxu0 0.0
        %731 = vmatpush2.msra.mxu0 0.0
        %732 = vmatprep.subr.mxu0 0.0
        %733 = vmatpush2.msra.mxu0 0.0
        %734 = vmatprep.subr.mxu0 0.0
        %735 = vmatpush2.msra.mxu0 0.0
        %736 = vmatprep.subr.mxu0 0.0
        %737 = vmatpush2.msra.mxu0 0.0
        %738 = vmatprep.subr.mxu0 0.0
        %739 = vmatpush2.msra.mxu0 0.0
        %740 = vmatprep.subr.mxu0 0.0
        %741 = vmatpush2.msra.mxu0 0.0
        %742 = vmatprep.subr.mxu0 0.0
        %743 = vmatpush2.msra.mxu0 0.0
        %744 = vmatprep.subr.mxu0 0.0
        %745 = vmatpush2.msra.mxu0 0.0
        %746 = vmatprep.mubr.f32.mxu0 0.0
        %747 = vmatmul.mubr.f32.gmra.mxu0 %v677
        %v748 = vpop.f32.mrf.mxu0
        %v749 = vadd.f32 0.0, %v748
        %v750 = vpop.f32.mrf.mxu0
        %751 = vmatprep.mubr.f32.mxu0 0.0
        %752 = vmatmul.mubr.f32.gmra.mxu0 %v680
        %v753 = vpop.f32.mrf.mxu0
        %v754 = vadd.f32 0.0, %v753
        %v755 = vpop.f32.mrf.mxu0
        %756 = vdwg.mxu0
        %757 = vrot.lane.b32.xlu0 %v545, 120
        %v758 = vpop.permute.xlu0 %757
        %759 = vrot.lane.b32.xlu0 %v548, 120
        %v760 = vpop.permute.xlu0 %759
        %761 = vrot.lane.b32.xlu0 %v545, 88
        %v762 = vpop.permute.xlu0 %761
        %763 = vrot.lane.b32.xlu0 %v548, 88
        %v764 = vpop.permute.xlu0 %763
        %v765 = vsel %vm559, %v758, 0
        %v767 = vsel %vm559, %v760, 0
        %v769 = vsel %vm559, %v762, 0
        %v771 = vsel %vm559, %v764, 0
        %773 = vmatprep.subr.mxu0 0.0
        %774 = vmatpush1.xpose.msra.mxu0 0.0
        %775 = vmatprep.subr.mxu0 0.0
        %776 = vmatpush1.xpose.msra.mxu0 0.0
        %777 = vmatprep.subr.mxu0 0.0
        %778 = vmatpush1.xpose.msra.mxu0 0.0
        %779 = vmatprep.subr.mxu0 0.0
        %780 = vmatpush1.xpose.msra.mxu0 0.0
        %781 = vmatprep.subr.mxu0 0.0
        %782 = vmatpush1.xpose.msra.mxu0 0.0
        %783 = vmatprep.subr.mxu0 0.0
        %784 = vmatpush1.xpose.msra.mxu0 0.0
        %785 = vmatprep.subr.mxu0 0.0
        %786 = vmatpush1.xpose.msra.mxu0 0.0
        %787 = vmatprep.subr.mxu0 0.0
        %788 = vmatpush1.xpose.msra.mxu0 0.0
        %789 = vmatprep.subr.mxu0 0.0
        %790 = vmatpush1.xpose.msra.mxu0 0.0
        %791 = vmatprep.subr.mxu0 0.0
        %792 = vmatpush1.xpose.msra.mxu0 0.0
        %793 = vmatprep.subr.mxu0 0.0
        %794 = vmatpush1.xpose.msra.mxu0 0.0
        %795 = vmatprep.subr.mxu0 0.0
        %796 = vmatpush1.xpose.msra.mxu0 0.0
        %797 = vmatprep.subr.mxu0 0.0
        %798 = vmatpush1.xpose.msra.mxu0 0.0
        %799 = vmatprep.subr.mxu0 0.0
        %800 = vmatpush1.xpose.msra.mxu0 0.0
        %801 = vmatprep.subr.mxu0 0.0
        %802 = vmatpush1.xpose.msra.mxu0 %v771
        %803 = vmatprep.subr.mxu0 0.0
        %804 = vmatpush1.xpose.msra.mxu0 %v769
        %805 = vmatprep.subr.mxu0 0.0
        %806 = vmatpush2.xpose.msra.mxu0 0.0
        %807 = vmatprep.subr.mxu0 0.0
        %808 = vmatpush2.xpose.msra.mxu0 0.0
        %809 = vmatprep.subr.mxu0 0.0
        %810 = vmatpush2.xpose.msra.mxu0 0.0
        %811 = vmatprep.subr.mxu0 0.0
        %812 = vmatpush2.xpose.msra.mxu0 0.0
        %813 = vmatprep.subr.mxu0 0.0
        %814 = vmatpush2.xpose.msra.mxu0 0.0
        %815 = vmatprep.subr.mxu0 0.0
        %816 = vmatpush2.xpose.msra.mxu0 0.0
        %817 = vmatprep.subr.mxu0 0.0
        %818 = vmatpush2.xpose.msra.mxu0 0.0
        %819 = vmatprep.subr.mxu0 0.0
        %820 = vmatpush2.xpose.msra.mxu0 0.0
        %821 = vmatprep.subr.mxu0 0.0
        %822 = vmatpush2.xpose.msra.mxu0 0.0
        %823 = vmatprep.subr.mxu0 0.0
        %824 = vmatpush2.xpose.msra.mxu0 0.0
        %825 = vmatprep.subr.mxu0 0.0
        %826 = vmatpush2.xpose.msra.mxu0 0.0
        %827 = vmatprep.subr.mxu0 0.0
        %828 = vmatpush2.xpose.msra.mxu0 0.0
        %829 = vmatprep.subr.mxu0 0.0
        %830 = vmatpush2.xpose.msra.mxu0 0.0
        %831 = vmatprep.subr.mxu0 0.0
        %832 = vmatpush2.xpose.msra.mxu0 0.0
        %833 = vmatprep.subr.mxu0 0.0
        %834 = vmatpush2.xpose.msra.mxu0 0.0
        %835 = vmatprep.subr.mxu0 0.0
        %836 = vmatpush2.xpose.msra.mxu0 0.0
        %837 = vmatprep.mubr.f32.mxu0 0.0
        %838 = vmatmul.mubr.f32.gmra.mxu0 %v765
        %v839 = vpop.f32.mrf.mxu0
        %v840 = vadd.f32 0.0, %v839
        %v841 = vpop.f32.mrf.mxu0
        %842 = vmatprep.mubr.f32.mxu0 0.0
        %843 = vmatmul.mubr.f32.gmra.mxu0 %v767
        %v844 = vpop.f32.mrf.mxu0
        %v845 = vadd.f32 0.0, %v844
        %v846 = vpop.f32.mrf.mxu0
        %847 = vdwg.mxu0
        %v848 = vmul.f32 %v840, 0.35355338
        %v849 = vmul.f32 %v845, 0.35355338
        %v850 = vadd.f32 %v848, %v551
        %v851 = vadd.f32 %v849, %v552
        %v852 = vsel %vm647, %v850, -inf
        %853 = vmax.xlane.f32.xlu0 %v852
        %v854 = vpop.xlane.xlu0 %853
        %v855 = vsel %vm647, %v851, -inf
        %856 = vmax.xlane.f32.xlu0 %v855
        %v857 = vpop.xlane.xlu0 %856
        %v858 = vsub.f32 %v850, %v854
        %v859 = vsub.f32 %v851, %v857
        %v860 = vmul.f32 %v858, 1.442695
        %v861 = vpow.pop %v860
        %v862 = vmul.f32 %v859, 1.442695
        %v863 = vpow.pop %v862
        %v864 = vsel %vm647, %v861, 0.0
        %865 = vadd.xlane.f32.xlu0 %v864
        %v866 = vpop.xlane.xlu0 %865
        %v867 = vsel %vm647, %v863, 0.0
        %868 = vadd.xlane.f32.xlu0 %v867
        %v869 = vpop.xlane.xlu0 %868
        %v870 = vrcp.pop %v866
        %v871 = vrcp.pop %v869
        %v872 = vmul.f32 %v861, %v870
        %v873 = vmul.f32 %v863, %v871
        %874 = vrot.lane.b32.xlu0 %v545, 56
        %v875 = vpop.permute.xlu0 %874
        %876 = vrot.lane.b32.xlu0 %v548, 56
        %v877 = vpop.permute.xlu0 %876
        %v881 = vsel %vm647, %v872, 0
        %v884 = vsel %vm647, %v873, 0
        %886 = vmatprep.subr.mxu0 0.0
        %887 = vmatpush1.msra.mxu0 0.0
        %888 = vmatprep.subr.mxu0 0.0
        %889 = vmatpush1.msra.mxu0 0.0
        %890 = vmatprep.subr.mxu0 0.0
        %891 = vmatpush1.msra.mxu0 0.0
        %892 = vmatprep.subr.mxu0 0.0
        %893 = vmatpush1.msra.mxu0 0.0
        %894 = vmatprep.subr.mxu0 0.0
        %895 = vmatpush1.msra.mxu0 0.0
        %896 = vmatprep.subr.mxu0 0.0
        %897 = vmatpush1.msra.mxu0 0.0
        %898 = vmatprep.subr.mxu0 0.0
        %899 = vmatpush1.msra.mxu0 0.0
        %900 = vmatprep.subr.mxu0 0.0
        %901 = vmatpush1.msra.mxu0 0.0
        %902 = vmatprep.subr.mxu0 0.0
        %903 = vmatpush1.msra.mxu0 0.0
        %904 = vmatprep.subr.mxu0 0.0
        %905 = vmatpush1.msra.mxu0 0.0
        %906 = vmatprep.subr.mxu0 0.0
        %907 = vmatpush1.msra.mxu0 0.0
        %908 = vmatprep.subr.mxu0 0.0
        %909 = vmatpush1.msra.mxu0 0.0
        %910 = vmatprep.subr.mxu0 0.0
        %911 = vmatpush1.msra.mxu0 0.0
        %912 = vmatprep.subr.mxu0 0.0
        %913 = vmatpush1.msra.mxu0 0.0
        %914 = vmatprep.subr.mxu0 0.0
        %915 = vmatpush1.msra.mxu0 %v877
        %916 = vmatprep.subr.mxu0 0.0
        %917 = vmatpush1.msra.mxu0 %v875
        %918 = vmatprep.subr.mxu0 0.0
        %919 = vmatpush2.msra.mxu0 0.0
        %920 = vmatprep.subr.mxu0 0.0
        %921 = vmatpush2.msra.mxu0 0.0
        %922 = vmatprep.subr.mxu0 0.0
        %923 = vmatpush2.msra.mxu0 0.0
        %924 = vmatprep.subr.mxu0 0.0
        %925 = vmatpush2.msra.mxu0 0.0
        %926 = vmatprep.subr.mxu0 0.0
        %927 = vmatpush2.msra.mxu0 0.0
        %928 = vmatprep.subr.mxu0 0.0
        %929 = vmatpush2.msra.mxu0 0.0
        %930 = vmatprep.subr.mxu0 0.0
        %931 = vmatpush2.msra.mxu0 0.0
        %932 = vmatprep.subr.mxu0 0.0
        %933 = vmatpush2.msra.mxu0 0.0
        %934 = vmatprep.subr.mxu0 0.0
        %935 = vmatpush2.msra.mxu0 0.0
        %936 = vmatprep.subr.mxu0 0.0
        %937 = vmatpush2.msra.mxu0 0.0
        %938 = vmatprep.subr.mxu0 0.0
        %939 = vmatpush2.msra.mxu0 0.0
        %940 = vmatprep.subr.mxu0 0.0
        %941 = vmatpush2.msra.mxu0 0.0
        %942 = vmatprep.subr.mxu0 0.0
        %943 = vmatpush2.msra.mxu0 0.0
        %944 = vmatprep.subr.mxu0 0.0
        %945 = vmatpush2.msra.mxu0 0.0
        %946 = vmatprep.subr.mxu0 0.0
        %947 = vmatpush2.msra.mxu0 0.0
        %948 = vmatprep.subr.mxu0 0.0
        %949 = vmatpush2.msra.mxu0 0.0
        %950 = vmatprep.mubr.f32.mxu0 0.0
        %951 = vmatmul.mubr.f32.gmra.mxu0 %v881
        %v952 = vpop.f32.mrf.mxu0
        %v953 = vadd.f32 0.0, %v952
        %v954 = vpop.f32.mrf.mxu0
        %955 = vmatprep.mubr.f32.mxu0 0.0
        %956 = vmatmul.mubr.f32.gmra.mxu0 %v884
        %v957 = vpop.f32.mrf.mxu0
        %v958 = vadd.f32 0.0, %v957
        %v959 = vpop.f32.mrf.mxu0
        %960 = vdwg.mxu0
        %961 = vrot.lane.b32.xlu0 %v545, 112
        %v962 = vpop.permute.xlu0 %961
        %963 = vrot.lane.b32.xlu0 %v548, 112
        %v964 = vpop.permute.xlu0 %963
        %965 = vrot.lane.b32.xlu0 %v545, 80
        %v966 = vpop.permute.xlu0 %965
        %967 = vrot.lane.b32.xlu0 %v548, 80
        %v968 = vpop.permute.xlu0 %967
        %v969 = vsel %vm559, %v962, 0
        %v971 = vsel %vm559, %v964, 0
        %v973 = vsel %vm559, %v966, 0
        %v975 = vsel %vm559, %v968, 0
        %977 = vmatprep.subr.mxu0 0.0
        %978 = vmatpush1.xpose.msra.mxu0 0.0
        %979 = vmatprep.subr.mxu0 0.0
        %980 = vmatpush1.xpose.msra.mxu0 0.0
        %981 = vmatprep.subr.mxu0 0.0
        %982 = vmatpush1.xpose.msra.mxu0 0.0
        %983 = vmatprep.subr.mxu0 0.0
        %984 = vmatpush1.xpose.msra.mxu0 0.0
        %985 = vmatprep.subr.mxu0 0.0
        %986 = vmatpush1.xpose.msra.mxu0 0.0
        %987 = vmatprep.subr.mxu0 0.0
        %988 = vmatpush1.xpose.msra.mxu0 0.0
        %989 = vmatprep.subr.mxu0 0.0
        %990 = vmatpush1.xpose.msra.mxu0 0.0
        %991 = vmatprep.subr.mxu0 0.0
        %992 = vmatpush1.xpose.msra.mxu0 0.0
        %993 = vmatprep.subr.mxu0 0.0
        %994 = vmatpush1.xpose.msra.mxu0 0.0
        %995 = vmatprep.subr.mxu0 0.0
        %996 = vmatpush1.xpose.msra.mxu0 0.0
        %997 = vmatprep.subr.mxu0 0.0
        %998 = vmatpush1.xpose.msra.mxu0 0.0
        %999 = vmatprep.subr.mxu0 0.0
        %1000 = vmatpush1.xpose.msra.mxu0 0.0
        %1001 = vmatprep.subr.mxu0 0.0
        %1002 = vmatpush1.xpose.msra.mxu0 0.0
        %1003 = vmatprep.subr.mxu0 0.0
        %1004 = vmatpush1.xpose.msra.mxu0 0.0
        %1005 = vmatprep.subr.mxu0 0.0
        %1006 = vmatpush1.xpose.msra.mxu0 %v975
        %1007 = vmatprep.subr.mxu0 0.0
        %1008 = vmatpush1.xpose.msra.mxu0 %v973
        %1009 = vmatprep.subr.mxu0 0.0
        %1010 = vmatpush2.xpose.msra.mxu0 0.0
        %1011 = vmatprep.subr.mxu0 0.0
        %1012 = vmatpush2.xpose.msra.mxu0 0.0
        %1013 = vmatprep.subr.mxu0 0.0
        %1014 = vmatpush2.xpose.msra.mxu0 0.0
        %1015 = vmatprep.subr.mxu0 0.0
        %1016 = vmatpush2.xpose.msra.mxu0 0.0
        %1017 = vmatprep.subr.mxu0 0.0
        %1018 = vmatpush2.xpose.msra.mxu0 0.0
        %1019 = vmatprep.subr.mxu0 0.0
        %1020 = vmatpush2.xpose.msra.mxu0 0.0
        %1021 = vmatprep.subr.mxu0 0.0
        %1022 = vmatpush2.xpose.msra.mxu0 0.0
        %1023 = vmatprep.subr.mxu0 0.0
        %1024 = vmatpush2.xpose.msra.mxu0 0.0
        %1025 = vmatprep.subr.mxu0 0.0
        %1026 = vmatpush2.xpose.msra.mxu0 0.0
        %1027 = vmatprep.subr.mxu0 0.0
        %1028 = vmatpush2.xpose.msra.mxu0 0.0
        %1029 = vmatprep.subr.mxu0 0.0
        %1030 = vmatpush2.xpose.msra.mxu0 0.0
        %1031 = vmatprep.subr.mxu0 0.0
        %1032 = vmatpush2.xpose.msra.mxu0 0.0
        %1033 = vmatprep.subr.mxu0 0.0
        %1034 = vmatpush2.xpose.msra.mxu0 0.0
        %1035 = vmatprep.subr.mxu0 0.0
        %1036 = vmatpush2.xpose.msra.mxu0 0.0
        %1037 = vmatprep.subr.mxu0 0.0
        %1038 = vmatpush2.xpose.msra.mxu0 0.0
        %1039 = vmatprep.subr.mxu0 0.0
        %1040 = vmatpush2.xpose.msra.mxu0 0.0
        %1041 = vmatprep.mubr.f32.mxu0 0.0
        %1042 = vmatmul.mubr.f32.gmra.mxu0 %v969
        %v1043 = vpop.f32.mrf.mxu0
        %v1044 = vadd.f32 0.0, %v1043
        %v1045 = vpop.f32.mrf.mxu0
        %1046 = vmatprep.mubr.f32.mxu0 0.0
        %1047 = vmatmul.mubr.f32.gmra.mxu0 %v971
        %v1048 = vpop.f32.mrf.mxu0
        %v1049 = vadd.f32 0.0, %v1048
        %v1050 = vpop.f32.mrf.mxu0
        %1051 = vdwg.mxu0
        %v1052 = vmul.f32 %v1044, 0.35355338
        %v1053 = vmul.f32 %v1049, 0.35355338
        %v1054 = vadd.f32 %v1052, %v551
        %v1055 = vadd.f32 %v1053, %v552
        %v1056 = vsel %vm647, %v1054, -inf
        %1057 = vmax.xlane.f32.xlu0 %v1056
        %v1058 = vpop.xlane.xlu0 %1057
        %v1059 = vsel %vm647, %v1055, -inf
        %1060 = vmax.xlane.f32.xlu0 %v1059
        %v1061 = vpop.xlane.xlu0 %1060
        %v1062 = vsub.f32 %v1054, %v1058
        %v1063 = vsub.f32 %v1055, %v1061
        %v1064 = vmul.f32 %v1062, 1.442695
        %v1065 = vpow.pop %v1064
        %v1066 = vmul.f32 %v1063, 1.442695
        %v1067 = vpow.pop %v1066
        %v1068 = vsel %vm647, %v1065, 0.0
        %1069 = vadd.xlane.f32.xlu0 %v1068
        %v1070 = vpop.xlane.xlu0 %1069
        %v1071 = vsel %vm647, %v1067, 0.0
        %1072 = vadd.xlane.f32.xlu0 %v1071
        %v1073 = vpop.xlane.xlu0 %1072
        %v1074 = vrcp.pop %v1070
        %v1075 = vrcp.pop %v1073
        %v1076 = vmul.f32 %v1065, %v1074
        %v1077 = vmul.f32 %v1067, %v1075
        %1078 = vrot.lane.b32.xlu0 %v545, 48
        %v1079 = vpop.permute.xlu0 %1078
        %1080 = vrot.lane.b32.xlu0 %v548, 48
        %v1081 = vpop.permute.xlu0 %1080
        %v1085 = vsel %vm647, %v1076, 0
        %v1088 = vsel %vm647, %v1077, 0
        %1090 = vmatprep.subr.mxu0 0.0
        %1091 = vmatpush1.msra.mxu0 0.0
        %1092 = vmatprep.subr.mxu0 0.0
        %1093 = vmatpush1.msra.mxu0 0.0
        %1094 = vmatprep.subr.mxu0 0.0
        %1095 = vmatpush1.msra.mxu0 0.0
        %1096 = vmatprep.subr.mxu0 0.0
        %1097 = vmatpush1.msra.mxu0 0.0
        %1098 = vmatprep.subr.mxu0 0.0
        %1099 = vmatpush1.msra.mxu0 0.0
        %1100 = vmatprep.subr.mxu0 0.0
        %1101 = vmatpush1.msra.mxu0 0.0
        %1102 = vmatprep.subr.mxu0 0.0
        %1103 = vmatpush1.msra.mxu0 0.0
        %1104 = vmatprep.subr.mxu0 0.0
        %1105 = vmatpush1.msra.mxu0 0.0
        %1106 = vmatprep.subr.mxu0 0.0
        %1107 = vmatpush1.msra.mxu0 0.0
        %1108 = vmatprep.subr.mxu0 0.0
        %1109 = vmatpush1.msra.mxu0 0.0
        %1110 = vmatprep.subr.mxu0 0.0
        %1111 = vmatpush1.msra.mxu0 0.0
        %1112 = vmatprep.subr.mxu0 0.0
        %1113 = vmatpush1.msra.mxu0 0.0
        %1114 = vmatprep.subr.mxu0 0.0
        %1115 = vmatpush1.msra.mxu0 0.0
        %1116 = vmatprep.subr.mxu0 0.0
        %1117 = vmatpush1.msra.mxu0 0.0
        %1118 = vmatprep.subr.mxu0 0.0
        %1119 = vmatpush1.msra.mxu0 %v1081
        %1120 = vmatprep.subr.mxu0 0.0
        %1121 = vmatpush1.msra.mxu0 %v1079
        %1122 = vmatprep.subr.mxu0 0.0
        %1123 = vmatpush2.msra.mxu0 0.0
        %1124 = vmatprep.subr.mxu0 0.0
        %1125 = vmatpush2.msra.mxu0 0.0
        %1126 = vmatprep.subr.mxu0 0.0
        %1127 = vmatpush2.msra.mxu0 0.0
        %1128 = vmatprep.subr.mxu0 0.0
        %1129 = vmatpush2.msra.mxu0 0.0
        %1130 = vmatprep.subr.mxu0 0.0
        %1131 = vmatpush2.msra.mxu0 0.0
        %1132 = vmatprep.subr.mxu0 0.0
        %1133 = vmatpush2.msra.mxu0 0.0
        %1134 = vmatprep.subr.mxu0 0.0
        %1135 = vmatpush2.msra.mxu0 0.0
        %1136 = vmatprep.subr.mxu0 0.0
        %1137 = vmatpush2.msra.mxu0 0.0
        %1138 = vmatprep.subr.mxu0 0.0
        %1139 = vmatpush2.msra.mxu0 0.0
        %1140 = vmatprep.subr.mxu0 0.0
        %1141 = vmatpush2.msra.mxu0 0.0
        %1142 = vmatprep.subr.mxu0 0.0
        %1143 = vmatpush2.msra.mxu0 0.0
        %1144 = vmatprep.subr.mxu0 0.0
        %1145 = vmatpush2.msra.mxu0 0.0
        %1146 = vmatprep.subr.mxu0 0.0
        %1147 = vmatpush2.msra.mxu0 0.0
        %1148 = vmatprep.subr.mxu0 0.0
        %1149 = vmatpush2.msra.mxu0 0.0
        %1150 = vmatprep.subr.mxu0 0.0
        %1151 = vmatpush2.msra.mxu0 0.0
        %1152 = vmatprep.subr.mxu0 0.0
        %1153 = vmatpush2.msra.mxu0 0.0
        %1154 = vmatprep.mubr.f32.mxu0 0.0
        %1155 = vmatmul.mubr.f32.gmra.mxu0 %v1085
        %v1156 = vpop.f32.mrf.mxu0
        %v1157 = vadd.f32 0.0, %v1156
        %v1158 = vpop.f32.mrf.mxu0
        %1159 = vmatprep.mubr.f32.mxu0 0.0
        %1160 = vmatmul.mubr.f32.gmra.mxu0 %v1088
        %v1161 = vpop.f32.mrf.mxu0
        %v1162 = vadd.f32 0.0, %v1161
        %v1163 = vpop.f32.mrf.mxu0
        %1164 = vdwg.mxu0
        %1165 = vrot.lane.b32.xlu0 %v545, 104
        %v1166 = vpop.permute.xlu0 %1165
        %1167 = vrot.lane.b32.xlu0 %v548, 104
        %v1168 = vpop.permute.xlu0 %1167
        %1169 = vrot.lane.b32.xlu0 %v545, 72
        %v1170 = vpop.permute.xlu0 %1169
        %1171 = vrot.lane.b32.xlu0 %v548, 72
        %v1172 = vpop.permute.xlu0 %1171
        %v1173 = vsel %vm559, %v1166, 0
        %v1175 = vsel %vm559, %v1168, 0
        %v1177 = vsel %vm559, %v1170, 0
        %v1179 = vsel %vm559, %v1172, 0
        %1181 = vmatprep.subr.mxu0 0.0
        %1182 = vmatpush1.xpose.msra.mxu0 0.0
        %1183 = vmatprep.subr.mxu0 0.0
        %1184 = vmatpush1.xpose.msra.mxu0 0.0
        %1185 = vmatprep.subr.mxu0 0.0
        %1186 = vmatpush1.xpose.msra.mxu0 0.0
        %1187 = vmatprep.subr.mxu0 0.0
        %1188 = vmatpush1.xpose.msra.mxu0 0.0
        %1189 = vmatprep.subr.mxu0 0.0
        %1190 = vmatpush1.xpose.msra.mxu0 0.0
        %1191 = vmatprep.subr.mxu0 0.0
        %1192 = vmatpush1.xpose.msra.mxu0 0.0
        %1193 = vmatprep.subr.mxu0 0.0
        %1194 = vmatpush1.xpose.msra.mxu0 0.0
        %1195 = vmatprep.subr.mxu0 0.0
        %1196 = vmatpush1.xpose.msra.mxu0 0.0
        %1197 = vmatprep.subr.mxu0 0.0
        %1198 = vmatpush1.xpose.msra.mxu0 0.0
        %1199 = vmatprep.subr.mxu0 0.0
        %1200 = vmatpush1.xpose.msra.mxu0 0.0
        %1201 = vmatprep.subr.mxu0 0.0
        %1202 = vmatpush1.xpose.msra.mxu0 0.0
        %1203 = vmatprep.subr.mxu0 0.0
        %1204 = vmatpush1.xpose.msra.mxu0 0.0
        %1205 = vmatprep.subr.mxu0 0.0
        %1206 = vmatpush1.xpose.msra.mxu0 0.0
        %1207 = vmatprep.subr.mxu0 0.0
        %1208 = vmatpush1.xpose.msra.mxu0 0.0
        %1209 = vmatprep.subr.mxu0 0.0
        %1210 = vmatpush1.xpose.msra.mxu0 %v1179
        %1211 = vmatprep.subr.mxu0 0.0
        %1212 = vmatpush1.xpose.msra.mxu0 %v1177
        %1213 = vmatprep.subr.mxu0 0.0
        %1214 = vmatpush2.xpose.msra.mxu0 0.0
        %1215 = vmatprep.subr.mxu0 0.0
        %1216 = vmatpush2.xpose.msra.mxu0 0.0
        %1217 = vmatprep.subr.mxu0 0.0
        %1218 = vmatpush2.xpose.msra.mxu0 0.0
        %1219 = vmatprep.subr.mxu0 0.0
        %1220 = vmatpush2.xpose.msra.mxu0 0.0
        %1221 = vmatprep.subr.mxu0 0.0
        %1222 = vmatpush2.xpose.msra.mxu0 0.0
        %1223 = vmatprep.subr.mxu0 0.0
        %1224 = vmatpush2.xpose.msra.mxu0 0.0
        %1225 = vmatprep.subr.mxu0 0.0
        %1226 = vmatpush2.xpose.msra.mxu0 0.0
        %1227 = vmatprep.subr.mxu0 0.0
        %1228 = vmatpush2.xpose.msra.mxu0 0.0
        %1229 = vmatprep.subr.mxu0 0.0
        %1230 = vmatpush2.xpose.msra.mxu0 0.0
        %1231 = vmatprep.subr.mxu0 0.0
        %1232 = vmatpush2.xpose.msra.mxu0 0.0
        %1233 = vmatprep.subr.mxu0 0.0
        %1234 = vmatpush2.xpose.msra.mxu0 0.0
        %1235 = vmatprep.subr.mxu0 0.0
        %1236 = vmatpush2.xpose.msra.mxu0 0.0
        %1237 = vmatprep.subr.mxu0 0.0
        %1238 = vmatpush2.xpose.msra.mxu0 0.0
        %1239 = vmatprep.subr.mxu0 0.0
        %1240 = vmatpush2.xpose.msra.mxu0 0.0
        %1241 = vmatprep.subr.mxu0 0.0
        %1242 = vmatpush2.xpose.msra.mxu0 0.0
        %1243 = vmatprep.subr.mxu0 0.0
        %1244 = vmatpush2.xpose.msra.mxu0 0.0
        %1245 = vmatprep.mubr.f32.mxu0 0.0
        %1246 = vmatmul.mubr.f32.gmra.mxu0 %v1173
        %v1247 = vpop.f32.mrf.mxu0
        %v1248 = vadd.f32 0.0, %v1247
        %v1249 = vpop.f32.mrf.mxu0
        %1250 = vmatprep.mubr.f32.mxu0 0.0
        %1251 = vmatmul.mubr.f32.gmra.mxu0 %v1175
        %v1252 = vpop.f32.mrf.mxu0
        %v1253 = vadd.f32 0.0, %v1252
        %v1254 = vpop.f32.mrf.mxu0
        %1255 = vdwg.mxu0
        %v1256 = vmul.f32 %v1248, 0.35355338
        %v1257 = vmul.f32 %v1253, 0.35355338
        %v1258 = vadd.f32 %v1256, %v551
        %v1259 = vadd.f32 %v1257, %v552
        %v1260 = vsel %vm647, %v1258, -inf
        %1261 = vmax.xlane.f32.xlu0 %v1260
        %v1262 = vpop.xlane.xlu0 %1261
        %v1263 = vsel %vm647, %v1259, -inf
        %1264 = vmax.xlane.f32.xlu0 %v1263
        %v1265 = vpop.xlane.xlu0 %1264
        %v1266 = vsub.f32 %v1258, %v1262
        %v1267 = vsub.f32 %v1259, %v1265
        %v1268 = vmul.f32 %v1266, 1.442695
        %v1269 = vpow.pop %v1268
        %v1270 = vmul.f32 %v1267, 1.442695
        %v1271 = vpow.pop %v1270
        %v1272 = vsel %vm647, %v1269, 0.0
        %1273 = vadd.xlane.f32.xlu0 %v1272
        %v1274 = vpop.xlane.xlu0 %1273
        %v1275 = vsel %vm647, %v1271, 0.0
        %1276 = vadd.xlane.f32.xlu0 %v1275
        %v1277 = vpop.xlane.xlu0 %1276
        %v1278 = vrcp.pop %v1274
        %v1279 = vrcp.pop %v1277
        %v1280 = vmul.f32 %v1269, %v1278
        %v1281 = vmul.f32 %v1271, %v1279
        %1282 = vrot.lane.b32.xlu0 %v545, 40
        %v1283 = vpop.permute.xlu0 %1282
        %1284 = vrot.lane.b32.xlu0 %v548, 40
        %v1285 = vpop.permute.xlu0 %1284
        %v1289 = vsel %vm647, %v1280, 0
        %v1292 = vsel %vm647, %v1281, 0
        %1294 = vmatprep.subr.mxu0 0.0
        %1295 = vmatpush1.msra.mxu0 0.0
        %1296 = vmatprep.subr.mxu0 0.0
        %1297 = vmatpush1.msra.mxu0 0.0
        %1298 = vmatprep.subr.mxu0 0.0
        %1299 = vmatpush1.msra.mxu0 0.0
        %1300 = vmatprep.subr.mxu0 0.0
        %1301 = vmatpush1.msra.mxu0 0.0
        %1302 = vmatprep.subr.mxu0 0.0
        %1303 = vmatpush1.msra.mxu0 0.0
        %1304 = vmatprep.subr.mxu0 0.0
        %1305 = vmatpush1.msra.mxu0 0.0
        %1306 = vmatprep.subr.mxu0 0.0
        %1307 = vmatpush1.msra.mxu0 0.0
        %1308 = vmatprep.subr.mxu0 0.0
        %1309 = vmatpush1.msra.mxu0 0.0
        %1310 = vmatprep.subr.mxu0 0.0
        %1311 = vmatpush1.msra.mxu0 0.0
        %1312 = vmatprep.subr.mxu0 0.0
        %1313 = vmatpush1.msra.mxu0 0.0
        %1314 = vmatprep.subr.mxu0 0.0
        %1315 = vmatpush1.msra.mxu0 0.0
        %1316 = vmatprep.subr.mxu0 0.0
        %1317 = vmatpush1.msra.mxu0 0.0
        %1318 = vmatprep.subr.mxu0 0.0
        %1319 = vmatpush1.msra.mxu0 0.0
        %1320 = vmatprep.subr.mxu0 0.0
        %1321 = vmatpush1.msra.mxu0 0.0
        %1322 = vmatprep.subr.mxu0 0.0
        %1323 = vmatpush1.msra.mxu0 %v1285
        %1324 = vmatprep.subr.mxu0 0.0
        %1325 = vmatpush1.msra.mxu0 %v1283
        %1326 = vmatprep.subr.mxu0 0.0
        %1327 = vmatpush2.msra.mxu0 0.0
        %1328 = vmatprep.subr.mxu0 0.0
        %1329 = vmatpush2.msra.mxu0 0.0
        %1330 = vmatprep.subr.mxu0 0.0
        %1331 = vmatpush2.msra.mxu0 0.0
        %1332 = vmatprep.subr.mxu0 0.0
        %1333 = vmatpush2.msra.mxu0 0.0
        %1334 = vmatprep.subr.mxu0 0.0
        %1335 = vmatpush2.msra.mxu0 0.0
        %1336 = vmatprep.subr.mxu0 0.0
        %1337 = vmatpush2.msra.mxu0 0.0
        %1338 = vmatprep.subr.mxu0 0.0
        %1339 = vmatpush2.msra.mxu0 0.0
        %1340 = vmatprep.subr.mxu0 0.0
        %1341 = vmatpush2.msra.mxu0 0.0
        %1342 = vmatprep.subr.mxu0 0.0
        %1343 = vmatpush2.msra.mxu0 0.0
        %1344 = vmatprep.subr.mxu0 0.0
        %1345 = vmatpush2.msra.mxu0 0.0
        %1346 = vmatprep.subr.mxu0 0.0
        %1347 = vmatpush2.msra.mxu0 0.0
        %1348 = vmatprep.subr.mxu0 0.0
        %1349 = vmatpush2.msra.mxu0 0.0
        %1350 = vmatprep.subr.mxu0 0.0
        %1351 = vmatpush2.msra.mxu0 0.0
        %1352 = vmatprep.subr.mxu0 0.0
        %1353 = vmatpush2.msra.mxu0 0.0
        %1354 = vmatprep.subr.mxu0 0.0
        %1355 = vmatpush2.msra.mxu0 0.0
        %1356 = vmatprep.subr.mxu0 0.0
        %1357 = vmatpush2.msra.mxu0 0.0
        %1358 = vmatprep.mubr.f32.mxu0 0.0
        %1359 = vmatmul.mubr.f32.gmra.mxu0 %v1289
        %v1360 = vpop.f32.mrf.mxu0
        %v1361 = vadd.f32 0.0, %v1360
        %v1362 = vpop.f32.mrf.mxu0
        %1363 = vmatprep.mubr.f32.mxu0 0.0
        %1364 = vmatmul.mubr.f32.gmra.mxu0 %v1292
        %v1365 = vpop.f32.mrf.mxu0
        %v1366 = vadd.f32 0.0, %v1365
        %v1367 = vpop.f32.mrf.mxu0
        %1368 = vdwg.mxu0
        %1371 = vrot.lane.b32.xlu0 %v953, 8
        %v1372 = vpop.permute.xlu0 %1371
        %1373 = vrot.lane.b32.xlu0 %v958, 8
        %v1374 = vpop.permute.xlu0 %1373
        %1379 = vrot.lane.b32.xlu0 %v1157, 16
        %v1380 = vpop.permute.xlu0 %1379
        %1381 = vrot.lane.b32.xlu0 %v1162, 16
        %v1382 = vpop.permute.xlu0 %1381
        %1387 = vrot.lane.b32.xlu0 %v1361, 24
        %v1388 = vpop.permute.xlu0 %1387
        %1389 = vrot.lane.b32.xlu0 %v1366, 24
        %v1390 = vpop.permute.xlu0 %1389
        %v1393 = vsel %vm559, %v749, %v1372
        %v1394 = vsel %vm559, %v754, %v1374
        %v1395 = vsel %vm647, %v1393, %v1380
        %v1396 = vsel %vm647, %v1394, %v1382
        %vm1397 = vcmask 195584
        %v1398 = vsel %vm1397, %v1395, %v1388
        %v1399 = vsel %vm1397, %v1396, %v1390
        %v1400 = vpack.c.bf16 %v1399, %v1398
        %v1401 = vld [vmem:[%s419] sm:$0xf]
        %v1402 = vld [vmem:[%s419 + $0x4] sm:$0xf]
        %v1403 = vld [vmem:[%s419 + $0x8] sm:$0xf]
        %v1404 = vld [vmem:[%s419 + $0xc] sm:$0xf]
        %v1409 = vunpack.c.l.b16 %v1401
        %v1410 = vunpack.c.l.b16 %v1402
        %v1411 = vunpack.c.l.b16 %v1403
        %v1412 = vunpack.c.l.b16 %v1404
        %v1413 = vpack.c.b16 %v1410, %v1409
        %v1414 = vpack.c.b16 %v1412, %v1411
        %v1418 = vsel %vm450, %v1400, 0
        %1420 = vmatprep.subr.bf16.mxu0 0
        %1421 = vmatpush1.bf16.msra.mxu0 0
        %1422 = vmatprep.subr.bf16.mxu0 0
        %1423 = vmatpush1.bf16.msra.mxu0 0
        %1424 = vmatprep.subr.bf16.mxu0 0
        %1425 = vmatpush1.bf16.msra.mxu0 0
        %1426 = vmatprep.subr.bf16.mxu0 0
        %1427 = vmatpush1.bf16.msra.mxu0 0
        %1428 = vmatprep.subr.bf16.mxu0 0
        %1429 = vmatpush1.bf16.msra.mxu0 0
        %1430 = vmatprep.subr.bf16.mxu0 0
        %1431 = vmatpush1.bf16.msra.mxu0 0
        %1432 = vmatprep.subr.bf16.mxu0 0
        %1433 = vmatpush1.bf16.msra.mxu0 %v1414
        %1434 = vmatprep.subr.bf16.mxu0 0
        %1435 = vmatpush1.bf16.msra.mxu0 %v1413
        %1436 = vmatprep.subr.bf16.mxu0 0
        %1437 = vmatpush2.bf16.msra.mxu0 0
        %1438 = vmatprep.subr.bf16.mxu0 0
        %1439 = vmatpush2.bf16.msra.mxu0 0
        %1440 = vmatprep.subr.bf16.mxu0 0
        %1441 = vmatpush2.bf16.msra.mxu0 0
        %1442 = vmatprep.subr.bf16.mxu0 0
        %1443 = vmatpush2.bf16.msra.mxu0 0
        %1444 = vmatprep.subr.bf16.mxu0 0
        %1445 = vmatpush2.bf16.msra.mxu0 0
        %1446 = vmatprep.subr.bf16.mxu0 0
        %1447 = vmatpush2.bf16.msra.mxu0 0
        %1448 = vmatprep.subr.bf16.mxu0 0
        %1449 = vmatpush2.bf16.msra.mxu0 0
        %1450 = vmatprep.subr.bf16.mxu0 0
        %1451 = vmatpush2.bf16.msra.mxu0 0
        %1452 = vmatprep.mubr.bf16.mxu0 0
        %1453 = vmatmul.mubr.bf16.gmra.mxu0 %v1418
        %v1454 = vpop.f32.mrf.mxu0
        %v1455 = vadd.f32 0.0, %v1454
        %v1456 = vpop.f32.mrf.mxu0
        %v1457 = vpop.f32.mrf.mxu0
        %v1458 = vadd.f32 0.0, %v1457
        %v1459 = vpop.f32.mrf.mxu0
        %1460 = vdwg.mxu0
        %v1461 = vadd.f32 %v447, %v1455
        %v1462 = vadd.f32 %v448, %v1458
        %v1463 = vlaneseq
        %v1464 = vshrl.u32 %v1463, 7
        %v1465 = vsub.s32 2, %v1464
        %v1466 = vrot.slane %v449, %v1465
        %v1467 = vadd.f32 %v1461, %v1466
        %v1468 = vadd.f32 %v1462, %v1466
        %v1469 = vsel %vm450, %v1467, 0.0
        %1470 = vadd.xlane.f32.xlu0 %v1469
        %v1471 = vpop.xlane.xlu0 %1470
        %v1472 = vsel %vm450, %v1468, 0.0
        %1473 = vadd.xlane.f32.xlu0 %v1472
        %v1474 = vpop.xlane.xlu0 %1473
        %v1475 = vmul.f32 %v1471, %v457
        %v1476 = vmul.f32 %v1474, %v457
        %v1477 = vsub.f32 %v1467, %v1475
        %v1478 = vsub.f32 %v1468, %v1476
        %v1479 = vmul.f32 %v1477, %v1477
        %v1480 = vmul.f32 %v1478, %v1478
        %v1481 = vsel %vm450, %v1479, 0.0
        %1482 = vadd.xlane.f32.xlu0 %v1481
        %v1483 = vpop.xlane.xlu0 %1482
        %v1484 = vsel %vm450, %v1480, 0.0
        %1485 = vadd.xlane.f32.xlu0 %v1484
        %v1486 = vpop.xlane.xlu0 %1485
        %v1487 = vmul.f32 %v1483, %v457
        %v1488 = vmul.f32 %v1486, %v457
        %v1489 = vadd.f32 %v1487, 1e-05
        %v1490 = vadd.f32 %v1488, 1e-05
        %v1491 = vrsqrt.pop %v1489
        %v1492 = vrsqrt.pop %v1490
        %v1493 = vmul.f32 %v1477, %v1491
        %v1494 = vmul.f32 %v1478, %v1492
        %v1495 = vlaneseq
        %v1496 = vshrl.u32 %v1495, 7
        %v1497 = vsub.s32 3, %v1496
        %v1498 = vrot.slane %v449, %v1497
        %v1499 = vmul.f32 %v1493, %v1498
        %v1500 = vmul.f32 %v1494, %v1498
        %v1501 = vlaneseq
        %v1502 = vshrl.u32 %v1501, 7
        %v1503 = vsub.s32 4, %v1502
        %v1504 = vrot.slane %v449, %v1503
        %v1505 = vadd.f32 %v1499, %v1504
        %v1506 = vadd.f32 %v1500, %v1504
        %v1507 = vpack.c.bf16 %v1506, %v1505
        %v1508 = vld [vmem:[%s424] sm:$0xf]
        %v1509 = vld [vmem:[%s424 + $0x4] sm:$0xf]
        %v1510 = vld [vmem:[%s424 + $0x8] sm:$0xf]
        %v1511 = vld [vmem:[%s424 + $0xc] sm:$0xf]
        %v1512 = vld [vmem:[%s436] sm:$0x1]
        %v1514 = vlaneseq
        %v1515 = vshrl.u32 %v1514, 7
        %v1516 = vsub.s32 0, %v1515
        %v1517 = vrot.slane %v1512, %v1516
        %v1523 = vunpack.c.l.b16 %v1508
        %v1524 = vunpack.c.l.b16 %v1509
        %v1525 = vunpack.c.l.b16 %v1510
        %v1526 = vunpack.c.l.b16 %v1511
        %v1527 = vpack.c.b16 %v1524, %v1523
        %v1528 = vpack.c.b16 %v1526, %v1525
        %v1532 = vsel %vm450, %v1507, 0
        %1534 = vmatprep.subr.bf16.mxu0 0
        %1535 = vmatpush1.bf16.msra.mxu0 0
        %1536 = vmatprep.subr.bf16.mxu0 0
        %1537 = vmatpush1.bf16.msra.mxu0 0
        %1538 = vmatprep.subr.bf16.mxu0 0
        %1539 = vmatpush1.bf16.msra.mxu0 0
        %1540 = vmatprep.subr.bf16.mxu0 0
        %1541 = vmatpush1.bf16.msra.mxu0 0
        %1542 = vmatprep.subr.bf16.mxu0 0
        %1543 = vmatpush1.bf16.msra.mxu0 0
        %1544 = vmatprep.subr.bf16.mxu0 0
        %1545 = vmatpush1.bf16.msra.mxu0 0
        %1546 = vmatprep.subr.bf16.mxu0 0
        %1547 = vmatpush1.bf16.msra.mxu0 %v1528
        %1548 = vmatprep.subr.bf16.mxu0 0
        %1549 = vmatpush1.bf16.msra.mxu0 %v1527
        %1550 = vmatprep.subr.bf16.mxu0 0
        %1551 = vmatpush2.bf16.msra.mxu0 0
        %1552 = vmatprep.subr.bf16.mxu0 0
        %1553 = vmatpush2.bf16.msra.mxu0 0
        %1554 = vmatprep.subr.bf16.mxu0 0
        %1555 = vmatpush2.bf16.msra.mxu0 0
        %1556 = vmatprep.subr.bf16.mxu0 0
        %1557 = vmatpush2.bf16.msra.mxu0 0
        %1558 = vmatprep.subr.bf16.mxu0 0
        %1559 = vmatpush2.bf16.msra.mxu0 0
        %1560 = vmatprep.subr.bf16.mxu0 0
        %1561 = vmatpush2.bf16.msra.mxu0 0
        %1562 = vmatprep.subr.bf16.mxu0 0
        %1563 = vmatpush2.bf16.msra.mxu0 0
        %1564 = vmatprep.subr.bf16.mxu0 0
        %1565 = vmatpush2.bf16.msra.mxu0 0
        %1566 = vmatprep.mubr.bf16.mxu0 0
        %1567 = vmatmul.mubr.bf16.gmra.mxu0 %v1532
        %v1568 = vpop.f32.mrf.mxu0
        %v1569 = vadd.f32 %v1517, %v1568
        %v1570 = vpop.f32.mrf.mxu0
        %v1571 = vpop.f32.mrf.mxu0
        %v1572 = vadd.f32 %v1517, %v1571
        %v1573 = vpop.f32.mrf.mxu0
        %1574 = vdwg.mxu0
        %v1575 = vmul.f32 %v1569, 0.5
        %v1576 = vmul.f32 %v1572, 0.5
        %v1577 = vmul.f32 %v1569, 0.044715
        %v1578 = vmul.f32 %v1572, 0.044715
        %v1579 = vmul.f32 %v1577, %v1569
        %v1580 = vmul.f32 %v1578, %v1572
        %v1581 = vmul.f32 %v1579, %v1569
        %v1582 = vmul.f32 %v1580, %v1572
        %v1583 = vadd.f32 %v1569, %v1581
        %v1584 = vadd.f32 %v1572, %v1582
        %v1585 = vmul.f32 %v1583, 0.7978846
        %v1586 = vmul.f32 %v1584, 0.7978846
        %v1587 = vtanh.pop %v1585
        %v1588 = vtanh.pop %v1586
        %v1589 = vadd.f32 %v1587, 1.0
        %v1590 = vadd.f32 %v1588, 1.0
        %v1591 = vmul.f32 %v1575, %v1589
        %v1592 = vmul.f32 %v1576, %v1590
        %v1593 = vpack.c.bf16 %v1592, %v1591
        %v1594 = vld [vmem:[%s429] sm:$0xf]
        %v1595 = vld [vmem:[%s429 + $0x4] sm:$0xf]
        %v1596 = vld [vmem:[%s429 + $0x8] sm:$0xf]
        %v1597 = vld [vmem:[%s429 + $0xc] sm:$0xf]
        %v1598 = vld [vmem:[%s429 + $0x10] sm:$0xf]
        %v1599 = vld [vmem:[%s429 + $0x14] sm:$0xf]
        %v1600 = vld [vmem:[%s429 + $0x18] sm:$0xf]
        %v1601 = vld [vmem:[%s429 + $0x1c] sm:$0xf]
        %v1602 = vld [vmem:[%s429 + $0x20] sm:$0xf]
        %v1603 = vld [vmem:[%s429 + $0x24] sm:$0xf]
        %v1604 = vld [vmem:[%s429 + $0x28] sm:$0xf]
        %v1605 = vld [vmem:[%s429 + $0x2c] sm:$0xf]
        %v1606 = vld [vmem:[%s429 + $0x30] sm:$0xf]
        %v1607 = vld [vmem:[%s429 + $0x34] sm:$0xf]
        %v1608 = vld [vmem:[%s429 + $0x38] sm:$0xf]
        %v1609 = vld [vmem:[%s429 + $0x3c] sm:$0xf]
        %v1626 = vunpack.c.l.b16 %v1594
        %v1627 = vunpack.c.l.b16 %v1595
        %v1628 = vunpack.c.l.b16 %v1596
        %v1629 = vunpack.c.l.b16 %v1597
        %v1630 = vunpack.c.l.b16 %v1598
        %v1631 = vunpack.c.l.b16 %v1599
        %v1632 = vunpack.c.l.b16 %v1600
        %v1633 = vunpack.c.l.b16 %v1601
        %v1634 = vunpack.c.l.b16 %v1602
        %v1635 = vunpack.c.l.b16 %v1603
        %v1636 = vunpack.c.l.b16 %v1604
        %v1637 = vunpack.c.l.b16 %v1605
        %v1638 = vunpack.c.l.b16 %v1606
        %v1639 = vunpack.c.l.b16 %v1607
        %v1640 = vunpack.c.l.b16 %v1608
        %v1641 = vunpack.c.l.b16 %v1609
        %v1642 = vpack.c.b16 %v1627, %v1626
        %v1643 = vpack.c.b16 %v1629, %v1628
        %v1644 = vpack.c.b16 %v1631, %v1630
        %v1645 = vpack.c.b16 %v1633, %v1632
        %v1646 = vpack.c.b16 %v1635, %v1634
        %v1647 = vpack.c.b16 %v1637, %v1636
        %v1648 = vpack.c.b16 %v1639, %v1638
        %v1649 = vpack.c.b16 %v1641, %v1640
        %1658 = vmatprep.subr.bf16.mxu0 0
        %1659 = vmatpush1.bf16.msra.mxu0 %v1649
        %1660 = vmatprep.subr.bf16.mxu0 0
        %1661 = vmatpush1.bf16.msra.mxu0 %v1648
        %1662 = vmatprep.subr.bf16.mxu0 0
        %1663 = vmatpush1.bf16.msra.mxu0 %v1647
        %1664 = vmatprep.subr.bf16.mxu0 0
        %1665 = vmatpush1.bf16.msra.mxu0 %v1646
        %1666 = vmatprep.subr.bf16.mxu0 0
        %1667 = vmatpush1.bf16.msra.mxu0 %v1645
        %1668 = vmatprep.subr.bf16.mxu0 0
        %1669 = vmatpush1.bf16.msra.mxu0 %v1644
        %1670 = vmatprep.subr.bf16.mxu0 0
        %1671 = vmatpush1.bf16.msra.mxu0 %v1643
        %1672 = vmatprep.subr.bf16.mxu0 0
        %1673 = vmatpush1.bf16.msra.mxu0 %v1642
        %1674 = vmatprep.subr.bf16.mxu0 0
        %1675 = vmatpush2.bf16.msra.mxu0 0
        %1676 = vmatprep.subr.bf16.mxu0 0
        %1677 = vmatpush2.bf16.msra.mxu0 0
        %1678 = vmatprep.subr.bf16.mxu0 0
        %1679 = vmatpush2.bf16.msra.mxu0 0
        %1680 = vmatprep.subr.bf16.mxu0 0
        %1681 = vmatpush2.bf16.msra.mxu0 0
        %1682 = vmatprep.subr.bf16.mxu0 0
        %1683 = vmatpush2.bf16.msra.mxu0 0
        %1684 = vmatprep.subr.bf16.mxu0 0
        %1685 = vmatpush2.bf16.msra.mxu0 0
        %1686 = vmatprep.subr.bf16.mxu0 0
        %1687 = vmatpush2.bf16.msra.mxu0 0
        %1688 = vmatprep.subr.bf16.mxu0 0
        %1689 = vmatpush2.bf16.msra.mxu0 0
        %1690 = vmatprep.mubr.bf16.mxu0 0
        %1691 = vmatmul.mubr.bf16.gmra.mxu0 %v1593
        %v1692 = vpop.f32.mrf.mxu0
        %v1693 = vadd.f32 0.0, %v1692
        %v1694 = vpop.f32.mrf.mxu0
        %v1695 = vpop.f32.mrf.mxu0
        %v1696 = vadd.f32 0.0, %v1695
        %v1697 = vpop.f32.mrf.mxu0
        %1698 = vdwg.mxu0
        %v1699 = vadd.f32 %v1467, %v1693
        %v1700 = vadd.f32 %v1468, %v1696
        %v1701 = vlaneseq
        %v1702 = vshrl.u32 %v1701, 7
        %v1703 = vsub.s32 5, %v1702
        %v1704 = vrot.slane %v449, %v1703
        %v1705 = vadd.f32 %v1699, %v1704
        %v1706 = vadd.f32 %v1700, %v1704
        %1707 = vst.msk [vmem:[#allocation2] sm:$0xff] %vm450, %v1705
        %1708 = vst.msk [vmem:[#allocation2 + $0x8] sm:$0xff] %vm450, %v1706
        %p1709 = scmp.eq.s32.totalorder %s22, 1
        // Predicated region
        $region65: #{tpu_custom_call.1} parent=59 // pred_check
          %p1710 = pneg %p1709
        $region66: #{tpu_custom_call.1} parent=59 // pred_check_branch
          %1712 = sbr.rel (%p1710) target = $region68
        $region67: #{tpu_custom_call.1} parent=59 // pred_region
          %v1713 = vld [vmem:[%s8] sm:$0x1]
          %v1714 = vld [vmem:[%s8 + $0x1] sm:$0x1]
          %v1715 = vsel %vm450, %v1705, 0.0
          %1716 = vadd.xlane.f32.xlu0 %v1715
          %v1717 = vpop.xlane.xlu0 %1716
          %v1718 = vsel %vm450, %v1706, 0.0
          %1719 = vadd.xlane.f32.xlu0 %v1718
          %v1720 = vpop.xlane.xlu0 %1719
          %v1721 = vmul.f32 %v1717, %v457
          %v1722 = vmul.f32 %v1720, %v457
          %v1723 = vsub.f32 %v1705, %v1721
          %v1724 = vsub.f32 %v1706, %v1722
          %v1725 = vmul.f32 %v1723, %v1723
          %v1726 = vmul.f32 %v1724, %v1724
          %v1727 = vsel %vm450, %v1725, 0.0
          %1728 = vadd.xlane.f32.xlu0 %v1727
          %v1729 = vpop.xlane.xlu0 %1728
          %v1730 = vsel %vm450, %v1726, 0.0
          %1731 = vadd.xlane.f32.xlu0 %v1730
          %v1732 = vpop.xlane.xlu0 %1731
          %v1733 = vmul.f32 %v1729, %v457
          %v1734 = vmul.f32 %v1732, %v457
          %v1735 = vadd.f32 %v1733, 1e-05
          %v1736 = vadd.f32 %v1734, 1e-05
          %v1737 = vrsqrt.pop %v1735
          %v1738 = vrsqrt.pop %v1736
          %v1739 = vmul.f32 %v1723, %v1737
          %v1740 = vmul.f32 %v1724, %v1738
          %v1741 = vlaneseq
          %v1742 = vshrl.u32 %v1741, 7
          %v1743 = vsub.s32 0, %v1742
          %v1744 = vrot.slane %v1713, %v1743
          %v1745 = vmul.f32 %v1739, %v1744
          %v1746 = vmul.f32 %v1740, %v1744
          %v1747 = vlaneseq
          %v1748 = vshrl.u32 %v1747, 7
          %v1749 = vsub.s32 0, %v1748
          %v1750 = vrot.slane %v1714, %v1749
          %v1751 = vadd.f32 %v1745, %v1750
          %v1752 = vadd.f32 %v1746, %v1750
          %v1753 = vpack.c.bf16 %v1752, %v1751
          %v1754 = vld [vmem:[%s9] sm:$0xf]
          %v1755 = vld [vmem:[%s9 + $0x4] sm:$0xf]
          %v1756 = vld [vmem:[%s9 + $0x8] sm:$0xf]
          %v1757 = vld [vmem:[%s9 + $0xc] sm:$0xf]
          %v1762 = vunpack.c.l.b16 %v1754
          %v1763 = vunpack.c.l.b16 %v1755
          %v1764 = vunpack.c.l.b16 %v1756
          %v1765 = vunpack.c.l.b16 %v1757
          %v1766 = vpack.c.b16 %v1763, %v1762
          %v1767 = vpack.c.b16 %v1765, %v1764
          %v1771 = vsel %vm450, %v1753, 0
          %1773 = vmatprep.subr.bf16.mxu0 0
          %1774 = vmatpush1.bf16.msra.mxu0 0
          %1775 = vmatprep.subr.bf16.mxu0 0
          %1776 = vmatpush1.bf16.msra.mxu0 0
          %1777 = vmatprep.subr.bf16.mxu0 0
          %1778 = vmatpush1.bf16.msra.mxu0 0
          %1779 = vmatprep.subr.bf16.mxu0 0
          %1780 = vmatpush1.bf16.msra.mxu0 0
          %1781 = vmatprep.subr.bf16.mxu0 0
          %1782 = vmatpush1.bf16.msra.mxu0 0
          %1783 = vmatprep.subr.bf16.mxu0 0
          %1784 = vmatpush1.bf16.msra.mxu0 0
          %1785 = vmatprep.subr.bf16.mxu0 0
          %1786 = vmatpush1.bf16.msra.mxu0 %v1767
          %1787 = vmatprep.subr.bf16.mxu0 0
          %1788 = vmatpush1.bf16.msra.mxu0 %v1766
          %1789 = vmatprep.subr.bf16.mxu0 0
          %1790 = vmatpush2.bf16.msra.mxu0 0
          %1791 = vmatprep.subr.bf16.mxu0 0
          %1792 = vmatpush2.bf16.msra.mxu0 0
          %1793 = vmatprep.subr.bf16.mxu0 0
          %1794 = vmatpush2.bf16.msra.mxu0 0
          %1795 = vmatprep.subr.bf16.mxu0 0
          %1796 = vmatpush2.bf16.msra.mxu0 0
          %1797 = vmatprep.subr.bf16.mxu0 0
          %1798 = vmatpush2.bf16.msra.mxu0 0
          %1799 = vmatprep.subr.bf16.mxu0 0
          %1800 = vmatpush2.bf16.msra.mxu0 0
          %1801 = vmatprep.subr.bf16.mxu0 0
          %1802 = vmatpush2.bf16.msra.mxu0 0
          %1803 = vmatprep.subr.bf16.mxu0 0
          %1804 = vmatpush2.bf16.msra.mxu0 0
          %1805 = vmatprep.mubr.bf16.mxu0 0
          %1806 = vmatmul.mubr.bf16.gmra.mxu0 %v1771
          %v1807 = vpop.f32.mrf.mxu0
          %v1808 = vadd.f32 0.0, %v1807
          %v1809 = vpop.f32.mrf.mxu0
          %v1810 = vpop.f32.mrf.mxu0
          %v1811 = vadd.f32 0.0, %v1810
          %v1812 = vpop.f32.mrf.mxu0
          %1813 = vdwg.mxu0
          %1814 = vst [vmem:[#allocation3] sm:$0xff] %v1808
          %1815 = vst [vmem:[#allocation3 + $0x8] sm:$0xff] %v1811
        $region68: #{tpu_custom_call.1} parent=59 // pred_fallthru
          _
        // Predicated region
        $region69: #{tpu_custom_call.1} parent=59 // pred_check
          %p1816 = pneg %p275
        $region70: #{tpu_custom_call.1} parent=59 // pred_check_branch
          %1818 = sbr.rel (%p1816) target = $region72
        $region71: #{tpu_custom_call.1} parent=59 // pred_region
          %s1820 = ssub.s32 256, 256
          %1821 = vsyncadd [#allocation4], %s1820
          %s1822 = sshll.u32 [#allocation3], 4
          %s1823 = int_to_ptr.vmem [resolvable:$true] %s1822
          %1828 = dma.vmem_to_hbm [thread:$0]  %s1823, 256, %s10, [#allocation4], 128, 128, 8
        $region72: #{tpu_custom_call.1} parent=59 // pred_fallthru
          _
        // Predicated region
        $region73: #{tpu_custom_call.1} parent=59 // pred_check
          %p1829 = pneg %p275
        $region74: #{tpu_custom_call.1} parent=59 // pred_check_branch
          %1831 = sbr.rel (%p1829) target = $region76
        $region75: #{tpu_custom_call.1} parent=59 // pred_region
          %1832 = dma.done [#allocation4], 256
        $region76: #{tpu_custom_call.1} parent=59 // pred_fallthru
          _
      $region60: #{tpu_custom_call.1} parent=5 // pred_fallthru
        _
      %p1833 = scmp.le.s32.totalorder 2, %s17
      // Predicated region
      $region77: #{tpu_custom_call.1} parent=5 // pred_check
        %p1834 = pneg %p1833
      $region78: #{tpu_custom_call.1} parent=5 // pred_check_branch
        %1836 = sbr.rel (%p1834) target = $region80
      $region79: #{tpu_custom_call.1} parent=5 // pred_region
        %s1837 = ssub.s32 %s17, 2
      $region80: #{tpu_custom_call.1} parent=5 // pred_fallthru
        _
    $region6: #{tpu_custom_call.1} parent=1 // loop_footer
      %s21 = sadd.s32 1, %s17
    $region7: #{tpu_custom_call.1} parent=1 // loop_footer_branch
      %16 = sbr.rel target = $region3
    $region8: #{tpu_custom_call.1} parent=1 // loop_exit
      _
    %1838 = vsyncpa [#allocation4], 1
    %s1839 = scalar_lea.sflag [#allocation4], 1
    %1840 = vsyncpa %s1839, 1

</llo_original>
